<compile_context>
chip_gen: v5e
topology: v5e:2x2
jax: 0.10.0
libtpu: 0.0.40
codegen_flags: <defaults>
</compile_context>

<pallas_src>
import jax
import jax.numpy as jnp
from jax.experimental import pallas as pl
from jax.experimental.pallas import tpu as pltpu

_H1, _H2, _OUT = 512, 256, 1


def _round_up(x, m):
    return (x + m - 1) // m * m


def _disc_kernel(x_img_ref, w1_img_ref, x_txt_ref, w1_txt_ref,
                 b1_ref, w2_ref, b2_ref, w3_ref, b3_ref,
                 o_ref, acc_ref):
    """Streams the layer-1 reduction over the image features; finishes the MLP
    (text contribution, bias + LeakyReLU, layers 2-3, sigmoid) on the last
    grid step."""
    k = pl.program_id(0)

    @pl.when(k == 0)
    def _():
        acc_ref[...] = jnp.zeros_like(acc_ref)

    # Layer-1 partial matmul on this K tile (bf16 operands, f32 accumulate).
    acc_ref[...] += jnp.dot(x_img_ref[...], w1_img_ref[...],
                            preferred_element_type=jnp.float32)

    @pl.when(k == pl.num_programs(0) - 1)
    def _():
        # Text-embedding contribution to layer 1 (tiny, VMEM-resident).
        h1 = acc_ref[...] + jnp.dot(x_txt_ref[...], w1_txt_ref[...],
                                    preferred_element_type=jnp.float32)
        h1 = h1 + b1_ref[...]
        h1 = jnp.where(h1 > 0, h1, 0.2 * h1)            # LeakyReLU(0.2)

        h2 = jnp.dot(h1, w2_ref[...],
                     preferred_element_type=jnp.float32) + b2_ref[...]
        h2 = jnp.where(h2 > 0, h2, 0.2 * h2)             # LeakyReLU(0.2)

        h3 = jnp.dot(h2, w3_ref[...],
                     preferred_element_type=jnp.float32) + b3_ref[...]
        o_ref[...] = jax.nn.sigmoid(h3).astype(o_ref.dtype)


def stage2_discriminator_forward(image, text_embedding, params, *,
                                 tk_target=8192):
    """image: (B, 3, H, W) float32; text_embedding: (B, T) float32."""
    B = image.shape[0]
    image_flat = image.reshape(B, -1)                    # (B, 3*H*W)
    k_img = image_flat.shape[1]
    T = text_embedding.shape[1]

    w1, b1 = params["w1"], params["b1"]
    w2, b2 = params["w2"], params["b2"]
    w3, b3 = params["w3"], params["b3"]

    # Split W1: big image part (streamed over the K grid) + tiny text part
    # (resident).  This removes the (B, F) concat from HBM entirely.
    w1_img = w1[:k_img, :]
    w1_txt = w1[k_img:, :]

    # --- K tile: minimize padding, keep the lane dim a multiple of 128. ---
    steps = max(1, pl.cdiv(k_img, tk_target))
    tk = _round_up(pl.cdiv(k_img, steps), 128)
    k_pad = tk * steps
    if k_pad != k_img:
        image_flat = jnp.pad(image_flat, ((0, 0), (0, k_pad - k_img)))
        w1_img = jnp.pad(w1_img, ((0, k_pad - k_img), (0, 0)))

    # Stream layer-1 operands in bf16 (halves HBM traffic on the dominant w1
    # stream); everything post-matmul stays f32.
    x_img = image_flat.astype(jnp.bfloat16)
    x_txt = text_embedding.astype(jnp.bfloat16)
    w1_img = w1_img.astype(jnp.bfloat16)
    w1_txt = w1_txt.astype(jnp.bfloat16)

    const = lambda k: (0, 0)
    in_specs = [
        pl.BlockSpec((B, tk), lambda k: (0, k)),         # x image tiles
        pl.BlockSpec((tk, _H1), lambda k: (k, 0)),       # w1 image tiles
        pl.BlockSpec((B, T), const),                     # text (resident)
        pl.BlockSpec((T, _H1), const),                   # w1 text (resident)
        pl.BlockSpec((1, _H1), const),                   # b1
        pl.BlockSpec((_H1, _H2), const),                 # w2
        pl.BlockSpec((1, _H2), const),                   # b2
        pl.BlockSpec((_H2, _OUT), const),                # w3
        pl.BlockSpec((1, _OUT), const),                  # b3
    ]
    out_spec = pl.BlockSpec((B, _OUT), const)

    # VMEM budget: double-buffered streamed tiles + resident weights + acc.
    resident_bytes = ((B * T + T * _H1) * 2
                      + (_H1 * _H2 + _H2 * _OUT + _H1 + _H2 + _OUT) * 4)
    vmem_limit = int(2 * (tk * _H1 * 2) + 2 * (B * tk * 2)
                     + resident_bytes + B * _H1 * 4 + (4 << 20))
    vmem_limit = max(vmem_limit, 16 << 20)               # modest floor

    flops = 2 * B * ((k_img + T) * _H1 + _H1 * _H2 + _H2 * _OUT)
    bytes_accessed = ((x_img.size + w1_img.size + x_txt.size + w1_txt.size) * 2
                      + (w2.size + w3.size + b1.size + b2.size + b3.size
                         + B * _OUT) * 4)

    # TODO(synk): optional v7x dual-TensorCore split of the K stream (parallel
    # leading axis + partial combine) is not implemented; single-core stream.
    out = pl.pallas_call(
        _disc_kernel,
        out_shape=jax.ShapeDtypeStruct((B, _OUT), jnp.float32),
        grid_spec=pltpu.PrefetchScalarGridSpec(
            num_scalar_prefetch=0,
            grid=(steps,),
            in_specs=in_specs,
            out_specs=out_spec,
            scratch_shapes=[pltpu.VMEM((B, _H1), jnp.float32)],
        ),
        compiler_params=pltpu.CompilerParams(
            dimension_semantics=("arbitrary",),
            vmem_limit_bytes=vmem_limit,
        ),
        cost_estimate=pl.CostEstimate(
            flops=flops, transcendentals=B, bytes_accessed=bytes_accessed),
    )(x_img, w1_img, x_txt, w1_txt, b1, w2, b2, w3, b3)
    return out


def init_params(key, text_embedding_dim, image_size):
    """Deterministic synthetic init (PyTorch-Linear-like uniform ranges)."""
    f_in = 3 * image_size * image_size + text_embedding_dim
    dims = [(f_in, _H1), (_H1, _H2), (_H2, _OUT)]
    params = {}
    for i, (din, dout) in enumerate(dims, start=1):
        key, kw, kb = jax.random.split(key, 3)
        bound = 1.0 / jnp.sqrt(jnp.float32(din))
        params[f"w{i}"] = jax.random.uniform(
            kw, (din, dout), jnp.float32, minval=-bound, maxval=bound)
        # biases kept 2D (1, dout) for clean lane-major broadcasting in-kernel
        params[f"b{i}"] = jax.random.uniform(
            kb, (1, dout), jnp.float32, minval=-bound, maxval=bound)
    return params


def _reference(image, text_embedding, params):
    B = image.shape[0]
    x = jnp.concatenate([image.reshape(B, -1), text_embedding], axis=1)
    h = x @ params["w1"] + params["b1"]
    h = jnp.where(h > 0, h, 0.2 * h)
    h = h @ params["w2"] + params["b2"]
    h = jnp.where(h > 0, h, 0.2 * h)
    h = h @ params["w3"] + params["b3"]
    return jax.nn.sigmoid(h)


if __name__ == "__main__":
    batch = 2
    image_size = 16
    text_embedding_dim = 32

    key = jax.random.PRNGKey(0)
    k_img_key, k_txt_key, k_par_key = jax.random.split(key, 3)

    image = jax.random.normal(
        k_img_key, (batch, 3, image_size, image_size), jnp.float32)
    text_embedding = jax.random.normal(
        k_txt_key, (batch, text_embedding_dim), jnp.float32)
    params = init_params(k_par_key, text_embedding_dim, image_size)

    out = stage2_discriminator_forward(image, text_embedding, params)
    out = jax.block_until_ready(out)

    assert out.shape == (batch, 1)
    assert bool(jnp.all((out >= 0.0) & (out <= 1.0)))

    ref = _reference(image, text_embedding, params)
    assert bool(jnp.max(jnp.abs(out - ref)) < 3e-2), "mismatch vs f32 reference"

    print("KERNEL_OK")
</pallas_src>

<mosaic_0001>
module attributes {stable_mosaic.version = 11 : i64} {
  func.func @_disc_kernel(%arg0: i32, %arg1: memref<2x768xbf16, #tpu.memory_space<vmem>>, %arg2: memref<768x512xbf16, #tpu.memory_space<vmem>>, %arg3: memref<2x32xbf16, #tpu.memory_space<vmem>>, %arg4: memref<32x512xbf16, #tpu.memory_space<vmem>>, %arg5: memref<1x512xf32, #tpu.memory_space<vmem>>, %arg6: memref<512x256xf32, #tpu.memory_space<vmem>>, %arg7: memref<1x256xf32, #tpu.memory_space<vmem>>, %arg8: memref<256x1xf32, #tpu.memory_space<vmem>>, %arg9: memref<1x1xf32, #tpu.memory_space<vmem>>, %arg10: memref<2x1xf32, #tpu.memory_space<vmem>>, %arg11: memref<2x512xf32, #tpu.memory_space<vmem>>) attributes {dimension_semantics = [#tpu.dimension_semantics<arbitrary>], iteration_bounds = array<i64: 1>, scalar_prefetch = 0 : i64, scratch_operands = 1 : i64, tpu.core_type = #tpu.core_type<tc>, window_params = [{transform_indices = @transform_0, window_bounds = array<i64: 2, 768>}, {transform_indices = @transform_1, window_bounds = array<i64: 768, 512>}, {pipeline_mode = #tpu.pipeline_mode<synchronous>, transform_indices = @transform_2, window_bounds = array<i64: 2, 32>}, {pipeline_mode = #tpu.pipeline_mode<synchronous>, transform_indices = @transform_3, window_bounds = array<i64: 32, 512>}, {pipeline_mode = #tpu.pipeline_mode<synchronous>, transform_indices = @transform_4, window_bounds = array<i64: 1, 512>}, {pipeline_mode = #tpu.pipeline_mode<synchronous>, transform_indices = @transform_5, window_bounds = array<i64: 512, 256>}, {pipeline_mode = #tpu.pipeline_mode<synchronous>, transform_indices = @transform_6, window_bounds = array<i64: 1, 256>}, {pipeline_mode = #tpu.pipeline_mode<synchronous>, transform_indices = @transform_7, window_bounds = array<i64: 256, 1>}, {pipeline_mode = #tpu.pipeline_mode<synchronous>, transform_indices = @transform_8, window_bounds = array<i64: 1, 1>}, {pipeline_mode = #tpu.pipeline_mode<synchronous>, transform_indices = @transform_9, window_bounds = array<i64: 2, 1>}]} {
    %c0_i32 = arith.constant 0 : i32
    %0 = arith.cmpi eq, %arg0, %c0_i32 : i32
    %1 = arith.extui %0 : i1 to i32
    %c0_i32_0 = arith.constant 0 : i32
    %2 = arith.cmpi ne, %1, %c0_i32_0 : i32
    scf.if %2 {
      %cst_10 = arith.constant 0.000000e+00 : f32
      %12 = vector.broadcast %cst_10 : f32 to vector<2x512xf32>
      %c0_11 = arith.constant 0 : index
      %c0_12 = arith.constant 0 : index
      %13 = vector.load %arg11[%c0_11, %c0_12] : memref<2x512xf32, #tpu.memory_space<vmem>>, vector<2x512xf32>
      tpu.vector_store %arg11[%c0_11, %c0_12], %12 {strides = array<i32>} : memref<2x512xf32, #tpu.memory_space<vmem>>, vector<2x512xf32>,
    } else {
    }
    %c0 = arith.constant 0 : index
    %c0_1 = arith.constant 0 : index
    %3 = vector.load %arg11[%c0, %c0_1] : memref<2x512xf32, #tpu.memory_space<vmem>>, vector<2x512xf32>
    %c0_2 = arith.constant 0 : index
    %c0_3 = arith.constant 0 : index
    %4 = vector.load %arg1[%c0_2, %c0_3] : memref<2x768xbf16, #tpu.memory_space<vmem>>, vector<2x768xbf16>
    %c0_4 = arith.constant 0 : index
    %c0_5 = arith.constant 0 : index
    %5 = vector.load %arg2[%c0_4, %c0_5] : memref<768x512xbf16, #tpu.memory_space<vmem>>, vector<768x512xbf16>
    %cst = arith.constant dense<0.000000e+00> : vector<2x512xf32>
    %6 = tpu.matmul %4, %5, %cst {dimension_numbers = #tpu.dot_dimension_numbers<[1], [0], [0], [1], [0, 0, 1, 1], [], []>} : vector<2x768xbf16>, vector<768x512xbf16>, vector<2x512xf32> -> vector<2x512xf32>
    %7 = arith.addf %3, %6 : vector<2x512xf32>
    %c0_6 = arith.constant 0 : index
    %c0_7 = arith.constant 0 : index
    %8 = vector.load %arg11[%c0_6, %c0_7] : memref<2x512xf32, #tpu.memory_space<vmem>>, vector<2x512xf32>
    tpu.vector_store %arg11[%c0_6, %c0_7], %7 {strides = array<i32>} : memref<2x512xf32, #tpu.memory_space<vmem>>, vector<2x512xf32>,
    %c0_i32_8 = arith.constant 0 : i32
    %9 = arith.cmpi eq, %arg0, %c0_i32_8 : i32
    %10 = arith.extui %9 : i1 to i32
    %c0_i32_9 = arith.constant 0 : i32
    %11 = arith.cmpi ne, %10, %c0_i32_9 : i32
    scf.if %11 {
      %c0_10 = arith.constant 0 : index
      %c0_11 = arith.constant 0 : index
      %12 = vector.load %arg11[%c0_10, %c0_11] : memref<2x512xf32, #tpu.memory_space<vmem>>, vector<2x512xf32>
      %c0_12 = arith.constant 0 : index
      %c0_13 = arith.constant 0 : index
      %13 = vector.load %arg3[%c0_12, %c0_13] : memref<2x32xbf16, #tpu.memory_space<vmem>>, vector<2x32xbf16>
      %c0_14 = arith.constant 0 : index
      %c0_15 = arith.constant 0 : index
      %14 = vector.load %arg4[%c0_14, %c0_15] : memref<32x512xbf16, #tpu.memory_space<vmem>>, vector<32x512xbf16>
      %cst_16 = arith.constant dense<0.000000e+00> : vector<2x512xf32>
      %15 = tpu.matmul %13, %14, %cst_16 {dimension_numbers = #tpu.dot_dimension_numbers<[1], [0], [0], [1], [0, 0, 1, 1], [], []>} : vector<2x32xbf16>, vector<32x512xbf16>, vector<2x512xf32> -> vector<2x512xf32>
      %16 = arith.addf %12, %15 : vector<2x512xf32>
      %c0_17 = arith.constant 0 : index
      %c0_18 = arith.constant 0 : index
      %17 = vector.load %arg5[%c0_17, %c0_18] : memref<1x512xf32, #tpu.memory_space<vmem>>, vector<1x512xf32>
      %18 = vector.broadcast %17 : vector<1x512xf32> to vector<2x512xf32>
      %19 = arith.addf %16, %18 : vector<2x512xf32>
      %cst_19 = arith.constant 0.000000e+00 : f32
      %20 = vector.broadcast %cst_19 : f32 to vector<2x512xf32>
      %21 = arith.cmpf ogt, %19, %20 : vector<2x512xf32>
      %cst_20 = arith.constant 2.000000e-01 : f32
      %22 = vector.broadcast %cst_20 : f32 to vector<2x512xf32>
      %23 = arith.mulf %22, %19 : vector<2x512xf32>
      %24 = arith.select %21, %19, %23 : vector<2x512xi1>, vector<2x512xf32>
      %c0_21 = arith.constant 0 : index
      %c0_22 = arith.constant 0 : index
      %25 = vector.load %arg6[%c0_21, %c0_22] : memref<512x256xf32, #tpu.memory_space<vmem>>, vector<512x256xf32>
      %cst_23 = arith.constant dense<0.000000e+00> : vector<2x256xf32>
      %26 = tpu.matmul %24, %25, %cst_23 {dimension_numbers = #tpu.dot_dimension_numbers<[1], [0], [0], [1], [0, 0, 1, 1], [], []>} : vector<2x512xf32>, vector<512x256xf32>, vector<2x256xf32> -> vector<2x256xf32>
      %c0_24 = arith.constant 0 : index
      %c0_25 = arith.constant 0 : index
      %27 = vector.load %arg7[%c0_24, %c0_25] : memref<1x256xf32, #tpu.memory_space<vmem>>, vector<1x256xf32>
      %28 = vector.broadcast %27 : vector<1x256xf32> to vector<2x256xf32>
      %29 = arith.addf %26, %28 : vector<2x256xf32>
      %cst_26 = arith.constant 0.000000e+00 : f32
      %30 = vector.broadcast %cst_26 : f32 to vector<2x256xf32>
      %31 = arith.cmpf ogt, %29, %30 : vector<2x256xf32>
      %cst_27 = arith.constant 2.000000e-01 : f32
      %32 = vector.broadcast %cst_27 : f32 to vector<2x256xf32>
      %33 = arith.mulf %32, %29 : vector<2x256xf32>
      %34 = arith.select %31, %29, %33 : vector<2x256xi1>, vector<2x256xf32>
      %c0_28 = arith.constant 0 : index
      %c0_29 = arith.constant 0 : index
      %35 = vector.load %arg8[%c0_28, %c0_29] : memref<256x1xf32, #tpu.memory_space<vmem>>, vector<256x1xf32>
      %cst_30 = arith.constant dense<0.000000e+00> : vector<2x1xf32>
      %36 = tpu.matmul %34, %35, %cst_30 {dimension_numbers = #tpu.dot_dimension_numbers<[1], [0], [0], [1], [0, 0, 1, 1], [], []>} : vector<2x256xf32>, vector<256x1xf32>, vector<2x1xf32> -> vector<2x1xf32>
      %c0_31 = arith.constant 0 : index
      %c0_32 = arith.constant 0 : index
      %37 = vector.load %arg9[%c0_31, %c0_32] : memref<1x1xf32, #tpu.memory_space<vmem>>, vector<1x1xf32>
      %38 = vector.broadcast %37 : vector<1x1xf32> to vector<2x1xf32>
      %39 = arith.addf %36, %38 : vector<2x1xf32>
      %40 = arith.negf %39 : vector<2x1xf32>
      %41 = math.exp %40 : vector<2x1xf32>
      %cst_33 = arith.constant 1.000000e+00 : f32
      %42 = vector.broadcast %cst_33 : f32 to vector<2x1xf32>
      %43 = arith.addf %42, %41 : vector<2x1xf32>
      %44 = arith.divf %42, %43 : vector<2x1xf32>
      %c0_34 = arith.constant 0 : index
      %c0_35 = arith.constant 0 : index
      %45 = vector.load %arg10[%c0_34, %c0_35] : memref<2x1xf32, #tpu.memory_space<vmem>>, vector<2x1xf32>
      tpu.vector_store %arg10[%c0_34, %c0_35], %44 {strides = array<i32>} : memref<2x1xf32, #tpu.memory_space<vmem>>, vector<2x1xf32>,
    } else {
    }
    return
  }
  func.func @transform_0(%arg0: i32) -> (i32, i32) {
    %c0_i32 = arith.constant 0 : i32
    %c0_i32_0 = arith.constant 0 : i32
    return %c0_i32, %arg0 : i32, i32
  }
  func.func @transform_1(%arg0: i32) -> (i32, i32) {
    %c0_i32 = arith.constant 0 : i32
    %c0_i32_0 = arith.constant 0 : i32
    return %arg0, %c0_i32 : i32, i32
  }
  func.func @transform_2(%arg0: i32) -> (i32, i32) {
    %c0_i32 = arith.constant 0 : i32
    %c0_i32_0 = arith.constant 0 : i32
    %c0_i32_1 = arith.constant 0 : i32
    return %c0_i32, %c0_i32_0 : i32, i32
  }
  func.func @transform_3(%arg0: i32) -> (i32, i32) {
    %c0_i32 = arith.constant 0 : i32
    %c0_i32_0 = arith.constant 0 : i32
    %c0_i32_1 = arith.constant 0 : i32
    return %c0_i32, %c0_i32_0 : i32, i32
  }
  func.func @transform_4(%arg0: i32) -> (i32, i32) {
    %c0_i32 = arith.constant 0 : i32
    %c0_i32_0 = arith.constant 0 : i32
    %c0_i32_1 = arith.constant 0 : i32
    return %c0_i32, %c0_i32_0 : i32, i32
  }
  func.func @transform_5(%arg0: i32) -> (i32, i32) {
    %c0_i32 = arith.constant 0 : i32
    %c0_i32_0 = arith.constant 0 : i32
    %c0_i32_1 = arith.constant 0 : i32
    return %c0_i32, %c0_i32_0 : i32, i32
  }
  func.func @transform_6(%arg0: i32) -> (i32, i32) {
    %c0_i32 = arith.constant 0 : i32
    %c0_i32_0 = arith.constant 0 : i32
    %c0_i32_1 = arith.constant 0 : i32
    return %c0_i32, %c0_i32_0 : i32, i32
  }
  func.func @transform_7(%arg0: i32) -> (i32, i32) {
    %c0_i32 = arith.constant 0 : i32
    %c0_i32_0 = arith.constant 0 : i32
    %c0_i32_1 = arith.constant 0 : i32
    return %c0_i32, %c0_i32_0 : i32, i32
  }
  func.func @transform_8(%arg0: i32) -> (i32, i32) {
    %c0_i32 = arith.constant 0 : i32
    %c0_i32_0 = arith.constant 0 : i32
    %c0_i32_1 = arith.constant 0 : i32
    return %c0_i32, %c0_i32_0 : i32, i32
  }
  func.func @transform_9(%arg0: i32) -> (i32, i32) {
    %c0_i32 = arith.constant 0 : i32
    %c0_i32_0 = arith.constant 0 : i32
    %c0_i32_1 = arith.constant 0 : i32
    return %c0_i32, %c0_i32_0 : i32, i32
  }
}

</mosaic_0001>

<llo_original>
// kernel: tpu_custom_call.1
$region0: #{tpu_custom_call.1}
  #allocation0 [shape = 'u32[]', space=smem, size = 0x4, offset = 0x4, fixed_abs, tag = 'smem constant byte address 0x4 - core index']
  #allocation1 [shape = 'u32[72,128]{1,0:T(1,128)}', space=vmem, size = 0x9000, scoped, tag = 'internal scratch']
  #allocation2 [shape = 'f32[2,512]{1,0:T(2,128)}', space=vmem, size = 0x1000, scoped, tag = 'scratch operand']
  #allocation3 [shape = 'f32[1,1]{1,0:T(1,128)S(1)}', space=vmem, size = 0x200, scoped, tag = 'scoped memory for tpu_custom_call.1']
  %s0 = inlined_call_operand.vmem [shape: bf16[2,768], index: 0, kind: input, shape index: {}]
  %s1 = inlined_call_operand.hbm [shape: bf16[768,512], index: 1, kind: input, shape index: {}]
  %s2 = inlined_call_operand.vmem [shape: bf16[2,32], index: 2, kind: input, shape index: {}]
  %s3 = inlined_call_operand.vmem [shape: bf16[32,512], index: 3, kind: input, shape index: {}]
  %s4 = inlined_call_operand.vmem [shape: f32[1,512], index: 4, kind: input, shape index: {}]
  %s5 = inlined_call_operand.hbm [shape: f32[512,256], index: 5, kind: input, shape index: {}]
  %s6 = inlined_call_operand.vmem [shape: f32[1,256], index: 6, kind: input, shape index: {}]
  %s7 = inlined_call_operand.vmem [shape: f32[256,1], index: 7, kind: input, shape index: {}]
  %s8 = inlined_call_operand.<no memory space> [shape: f32[1,1], index: 8, kind: input, shape index: {}]
  %s9 = inlined_call_operand.vmem [shape: f32[2,1], index: 9, kind: output, shape index: {}]
  %s10 = sld [smem:[#allocation0]]
  $region62: #{tpu_custom_call.1} parent=0
    _
  %s12 = ssub.s32 1, %s10
  %s13 = scalar_select 0, %s12, %s10
  %v14 = vstv %s8
  %15 = vst [vmem:[#allocation3] sm:$0x1] %v14
  $region1: #{tpu_custom_call.1} parent=0
    #allocation4 [shape = 'u8[786432]{0}', space=vmem, size = 0xc0000, scoped, tag = 'input window, operand 1, single buffered']
    #allocation5 [shape = 's32[1]{0}', space=sflag, size = 0x4, scoped, tag = 'scoped memory for tpu_custom_call.1']
    #allocation6 [shape = 'u8[524288]{0}', space=vmem, size = 0x80000, scoped, tag = 'input window, operand 5, single buffered']
    #allocation7 [shape = 's32[1]{0}', space=sflag, size = 0x4, scoped, tag = 'scoped memory for tpu_custom_call.1']
    %16 = vsyncpa [#allocation5], 0
    %17 = vsyncpa [#allocation7], 0
    // Predicated region
    $region2: #{tpu_custom_call.1} parent=1 // pred_check
      _
    $region3: #{tpu_custom_call.1} parent=1 // pred_check_branch
      %19 = sbr.rel (0) target = $region5
    $region4: #{tpu_custom_call.1} parent=1 // pred_region
      _
    $region5: #{tpu_custom_call.1} parent=1 // pred_fallthru
      _
    // Predicated region
    $region6: #{tpu_custom_call.1} parent=1 // pred_check
      _
    $region7: #{tpu_custom_call.1} parent=1 // pred_check_branch
      %21 = sbr.rel (0) target = $region9
    $region8: #{tpu_custom_call.1} parent=1 // pred_region
      %23 = vsyncadd [#allocation5], 0
      %s24 = sshll.u32 %s1, 4
      %s25 = int_to_ptr.hbm [resolvable:$true] %s24
      %s26 = sshll.u32 [#allocation4], 4
      %s27 = int_to_ptr.vmem [resolvable:$true] %s26
      %32 = dma.hbm_to_vmem [thread:$0]  %s25, 24576, %s27, [#allocation5], 256, 256, 16
    $region9: #{tpu_custom_call.1} parent=1 // pred_fallthru
      _
    // Predicated region
    $region10: #{tpu_custom_call.1} parent=1 // pred_check
      _
    $region11: #{tpu_custom_call.1} parent=1 // pred_check_branch
      %34 = sbr.rel (0) target = $region13
    $region12: #{tpu_custom_call.1} parent=1 // pred_region
      _
    $region13: #{tpu_custom_call.1} parent=1 // pred_fallthru
      _
    // Predicated region
    $region14: #{tpu_custom_call.1} parent=1 // pred_check
      _
    $region15: #{tpu_custom_call.1} parent=1 // pred_check_branch
      %36 = sbr.rel (0) target = $region17
    $region16: #{tpu_custom_call.1} parent=1 // pred_region
      _
    $region17: #{tpu_custom_call.1} parent=1 // pred_fallthru
      _
    // Predicated region
    $region18: #{tpu_custom_call.1} parent=1 // pred_check
      _
    $region19: #{tpu_custom_call.1} parent=1 // pred_check_branch
      %38 = sbr.rel (0) target = $region21
    $region20: #{tpu_custom_call.1} parent=1 // pred_region
      _
    $region21: #{tpu_custom_call.1} parent=1 // pred_fallthru
      _
    // Predicated region
    $region22: #{tpu_custom_call.1} parent=1 // pred_check
      _
    $region23: #{tpu_custom_call.1} parent=1 // pred_check_branch
      %40 = sbr.rel (0) target = $region25
    $region24: #{tpu_custom_call.1} parent=1 // pred_region
      %42 = vsyncadd [#allocation7], 0
      %s43 = sshll.u32 %s5, 4
      %s44 = int_to_ptr.hbm [resolvable:$true] %s43
      %s45 = sshll.u32 [#allocation6], 4
      %s46 = int_to_ptr.vmem [resolvable:$true] %s45
      %51 = dma.hbm_to_vmem [thread:$0]  %s44, 16384, %s46, [#allocation7], 256, 256, 16
    $region25: #{tpu_custom_call.1} parent=1 // pred_fallthru
      _
    // Predicated region
    $region26: #{tpu_custom_call.1} parent=1 // pred_check
      _
    $region27: #{tpu_custom_call.1} parent=1 // pred_check_branch
      %53 = sbr.rel (0) target = $region29
    $region28: #{tpu_custom_call.1} parent=1 // pred_region
      _
    $region29: #{tpu_custom_call.1} parent=1 // pred_fallthru
      _
    // Predicated region
    $region30: #{tpu_custom_call.1} parent=1 // pred_check
      _
    $region31: #{tpu_custom_call.1} parent=1 // pred_check_branch
      %55 = sbr.rel (0) target = $region33
    $region32: #{tpu_custom_call.1} parent=1 // pred_region
      _
    $region33: #{tpu_custom_call.1} parent=1 // pred_fallthru
      _
    // Predicated region
    $region34: #{tpu_custom_call.1} parent=1 // pred_check
      _
    $region35: #{tpu_custom_call.1} parent=1 // pred_check_branch
      %57 = sbr.rel (0) target = $region37
    $region36: #{tpu_custom_call.1} parent=1 // pred_region
      _
    $region37: #{tpu_custom_call.1} parent=1 // pred_fallthru
      _
    // Predicated region
    $region38: #{tpu_custom_call.1} parent=1 // pred_check
      _
    $region39: #{tpu_custom_call.1} parent=1 // pred_check_branch
      %59 = sbr.rel (0) target = $region41
    $region40: #{tpu_custom_call.1} parent=1 // pred_region
      %61 = dma.done [#allocation5], 24576
    $region41: #{tpu_custom_call.1} parent=1 // pred_fallthru
      _
    // Predicated region
    $region42: #{tpu_custom_call.1} parent=1 // pred_check
      _
    $region43: #{tpu_custom_call.1} parent=1 // pred_check_branch
      %63 = sbr.rel (0) target = $region45
    $region44: #{tpu_custom_call.1} parent=1 // pred_region
      %65 = dma.done [#allocation7], 16384
    $region45: #{tpu_custom_call.1} parent=1 // pred_fallthru
      _
    %p67 = scmp.eq.s32.totalorder 0, 0
    // Predicated region
    $region46: #{tpu_custom_call.1} parent=1 // pred_check
      %p68 = pneg %p67
    $region47: #{tpu_custom_call.1} parent=1 // pred_check_branch
      %70 = sbr.rel (%p68) target = $region49
    $region48: #{tpu_custom_call.1} parent=1 // pred_region
      %71 = vst [vmem:[#allocation2] sm:$0xff] 0.0
    $region49: #{tpu_custom_call.1} parent=1 // pred_fallthru
      _
    %v72 = vld [vmem:[#allocation2] sm:$0xff]
    %v73 = vld [vmem:[%s0] sm:$0x3f]
    %v74 = vld [vmem:[#allocation4] sm:$0xff]
    %v75 = vld [vmem:[#allocation4 + $0x8] sm:$0xff]
    %v76 = vld [vmem:[#allocation4 + $0x10] sm:$0xff]
    %v77 = vld [vmem:[#allocation4 + $0x18] sm:$0xff]
    %v78 = vld [vmem:[#allocation4 + $0x20] sm:$0xff]
    %v79 = vld [vmem:[#allocation4 + $0x28] sm:$0xff]
    %v80 = vld [vmem:[#allocation4 + $0x30] sm:$0xff]
    %v81 = vld [vmem:[#allocation4 + $0x38] sm:$0xff]
    %v82 = vld [vmem:[#allocation4 + $0x40] sm:$0xff]
    %v83 = vld [vmem:[#allocation4 + $0x48] sm:$0xff]
    %v84 = vld [vmem:[#allocation4 + $0x50] sm:$0xff]
    %v85 = vld [vmem:[#allocation4 + $0x58] sm:$0xff]
    %v86 = vld [vmem:[#allocation4 + $0x60] sm:$0xff]
    %v87 = vld [vmem:[#allocation4 + $0x68] sm:$0xff]
    %v88 = vld [vmem:[#allocation4 + $0x70] sm:$0xff]
    %v89 = vld [vmem:[#allocation4 + $0x78] sm:$0xff]
    %v90 = vld [vmem:[#allocation4 + $0x80] sm:$0xff]
    %v91 = vld [vmem:[#allocation4 + $0x88] sm:$0xff]
    %v92 = vld [vmem:[#allocation4 + $0x90] sm:$0xff]
    %v93 = vld [vmem:[#allocation4 + $0x98] sm:$0xff]
    %v94 = vld [vmem:[#allocation4 + $0xa0] sm:$0xff]
    %v95 = vld [vmem:[#allocation4 + $0xa8] sm:$0xff]
    %v96 = vld [vmem:[#allocation4 + $0xb0] sm:$0xff]
    %v97 = vld [vmem:[#allocation4 + $0xb8] sm:$0xff]
    %v98 = vld [vmem:[#allocation4 + $0xc0] sm:$0xff]
    %v99 = vld [vmem:[#allocation4 + $0xc8] sm:$0xff]
    %v100 = vld [vmem:[#allocation4 + $0xd0] sm:$0xff]
    %v101 = vld [vmem:[#allocation4 + $0xd8] sm:$0xff]
    %v102 = vld [vmem:[#allocation4 + $0xe0] sm:$0xff]
    %v103 = vld [vmem:[#allocation4 + $0xe8] sm:$0xff]
    %v104 = vld [vmem:[#allocation4 + $0xf0] sm:$0xff]
    %v105 = vld [vmem:[#allocation4 + $0xf8] sm:$0xff]
    %v106 = vld [vmem:[#allocation4 + $0x100] sm:$0xff]
    %v107 = vld [vmem:[#allocation4 + $0x108] sm:$0xff]
    %v108 = vld [vmem:[#allocation4 + $0x110] sm:$0xff]
    %v109 = vld [vmem:[#allocation4 + $0x118] sm:$0xff]
    %v110 = vld [vmem:[#allocation4 + $0x120] sm:$0xff]
    %v111 = vld [vmem:[#allocation4 + $0x128] sm:$0xff]
    %v112 = vld [vmem:[#allocation4 + $0x130] sm:$0xff]
    %v113 = vld [vmem:[#allocation4 + $0x138] sm:$0xff]
    %v114 = vld [vmem:[#allocation4 + $0x140] sm:$0xff]
    %v115 = vld [vmem:[#allocation4 + $0x148] sm:$0xff]
    %v116 = vld [vmem:[#allocation4 + $0x150] sm:$0xff]
    %v117 = vld [vmem:[#allocation4 + $0x158] sm:$0xff]
    %v118 = vld [vmem:[#allocation4 + $0x160] sm:$0xff]
    %v119 = vld [vmem:[#allocation4 + $0x168] sm:$0xff]
    %v120 = vld [vmem:[#allocation4 + $0x170] sm:$0xff]
    %v121 = vld [vmem:[#allocation4 + $0x178] sm:$0xff]
    %v122 = vld [vmem:[#allocation4 + $0x180] sm:$0xff]
    %v123 = vld [vmem:[#allocation4 + $0x188] sm:$0xff]
    %v124 = vld [vmem:[#allocation4 + $0x190] sm:$0xff]
    %v125 = vld [vmem:[#allocation4 + $0x198] sm:$0xff]
    %v126 = vld [vmem:[#allocation4 + $0x1a0] sm:$0xff]
    %v127 = vld [vmem:[#allocation4 + $0x1a8] sm:$0xff]
    %v128 = vld [vmem:[#allocation4 + $0x1b0] sm:$0xff]
    %v129 = vld [vmem:[#allocation4 + $0x1b8] sm:$0xff]
    %v130 = vld [vmem:[#allocation4 + $0x1c0] sm:$0xff]
    %v131 = vld [vmem:[#allocation4 + $0x1c8] sm:$0xff]
    %v132 = vld [vmem:[#allocation4 + $0x1d0] sm:$0xff]
    %v133 = vld [vmem:[#allocation4 + $0x1d8] sm:$0xff]
    %v134 = vld [vmem:[#allocation4 + $0x1e0] sm:$0xff]
    %v135 = vld [vmem:[#allocation4 + $0x1e8] sm:$0xff]
    %v136 = vld [vmem:[#allocation4 + $0x1f0] sm:$0xff]
    %v137 = vld [vmem:[#allocation4 + $0x1f8] sm:$0xff]
    %v138 = vld [vmem:[#allocation4 + $0x200] sm:$0xff]
    %v139 = vld [vmem:[#allocation4 + $0x208] sm:$0xff]
    %v140 = vld [vmem:[#allocation4 + $0x210] sm:$0xff]
    %v141 = vld [vmem:[#allocation4 + $0x218] sm:$0xff]
    %v142 = vld [vmem:[#allocation4 + $0x220] sm:$0xff]
    %v143 = vld [vmem:[#allocation4 + $0x228] sm:$0xff]
    %v144 = vld [vmem:[#allocation4 + $0x230] sm:$0xff]
    %v145 = vld [vmem:[#allocation4 + $0x238] sm:$0xff]
    %v146 = vld [vmem:[#allocation4 + $0x240] sm:$0xff]
    %v147 = vld [vmem:[#allocation4 + $0x248] sm:$0xff]
    %v148 = vld [vmem:[#allocation4 + $0x250] sm:$0xff]
    %v149 = vld [vmem:[#allocation4 + $0x258] sm:$0xff]
    %v150 = vld [vmem:[#allocation4 + $0x260] sm:$0xff]
    %v151 = vld [vmem:[#allocation4 + $0x268] sm:$0xff]
    %v152 = vld [vmem:[#allocation4 + $0x270] sm:$0xff]
    %v153 = vld [vmem:[#allocation4 + $0x278] sm:$0xff]
    %v154 = vld [vmem:[#allocation4 + $0x280] sm:$0xff]
    %v155 = vld [vmem:[#allocation4 + $0x288] sm:$0xff]
    %v156 = vld [vmem:[#allocation4 + $0x290] sm:$0xff]
    %v157 = vld [vmem:[#allocation4 + $0x298] sm:$0xff]
    %v158 = vld [vmem:[#allocation4 + $0x2a0] sm:$0xff]
    %v159 = vld [vmem:[#allocation4 + $0x2a8] sm:$0xff]
    %v160 = vld [vmem:[#allocation4 + $0x2b0] sm:$0xff]
    %v161 = vld [vmem:[#allocation4 + $0x2b8] sm:$0xff]
    %v162 = vld [vmem:[#allocation4 + $0x2c0] sm:$0xff]
    %v163 = vld [vmem:[#allocation4 + $0x2c8] sm:$0xff]
    %v164 = vld [vmem:[#allocation4 + $0x2d0] sm:$0xff]
    %v165 = vld [vmem:[#allocation4 + $0x2d8] sm:$0xff]
    %v166 = vld [vmem:[#allocation4 + $0x2e0] sm:$0xff]
    %v167 = vld [vmem:[#allocation4 + $0x2e8] sm:$0xff]
    %v168 = vld [vmem:[#allocation4 + $0x2f0] sm:$0xff]
    %v169 = vld [vmem:[#allocation4 + $0x2f8] sm:$0xff]
    %v170 = vld [vmem:[#allocation4 + $0x300] sm:$0xff]
    %v171 = vld [vmem:[#allocation4 + $0x308] sm:$0xff]
    %v172 = vld [vmem:[#allocation4 + $0x310] sm:$0xff]
    %v173 = vld [vmem:[#allocation4 + $0x318] sm:$0xff]
    %v174 = vld [vmem:[#allocation4 + $0x320] sm:$0xff]
    %v175 = vld [vmem:[#allocation4 + $0x328] sm:$0xff]
    %v176 = vld [vmem:[#allocation4 + $0x330] sm:$0xff]
    %v177 = vld [vmem:[#allocation4 + $0x338] sm:$0xff]
    %v178 = vld [vmem:[#allocation4 + $0x340] sm:$0xff]
    %v179 = vld [vmem:[#allocation4 + $0x348] sm:$0xff]
    %v180 = vld [vmem:[#allocation4 + $0x350] sm:$0xff]
    %v181 = vld [vmem:[#allocation4 + $0x358] sm:$0xff]
    %v182 = vld [vmem:[#allocation4 + $0x360] sm:$0xff]
    %v183 = vld [vmem:[#allocation4 + $0x368] sm:$0xff]
    %v184 = vld [vmem:[#allocation4 + $0x370] sm:$0xff]
    %v185 = vld [vmem:[#allocation4 + $0x378] sm:$0xff]
    %v186 = vld [vmem:[#allocation4 + $0x380] sm:$0xff]
    %v187 = vld [vmem:[#allocation4 + $0x388] sm:$0xff]
    %v188 = vld [vmem:[#allocation4 + $0x390] sm:$0xff]
    %v189 = vld [vmem:[#allocation4 + $0x398] sm:$0xff]
    %v190 = vld [vmem:[#allocation4 + $0x3a0] sm:$0xff]
    %v191 = vld [vmem:[#allocation4 + $0x3a8] sm:$0xff]
    %v192 = vld [vmem:[#allocation4 + $0x3b0] sm:$0xff]
    %v193 = vld [vmem:[#allocation4 + $0x3b8] sm:$0xff]
    %v194 = vld [vmem:[#allocation4 + $0x3c0] sm:$0xff]
    %v195 = vld [vmem:[#allocation4 + $0x3c8] sm:$0xff]
    %v196 = vld [vmem:[#allocation4 + $0x3d0] sm:$0xff]
    %v197 = vld [vmem:[#allocation4 + $0x3d8] sm:$0xff]
    %v198 = vld [vmem:[#allocation4 + $0x3e0] sm:$0xff]
    %v199 = vld [vmem:[#allocation4 + $0x3e8] sm:$0xff]
    %v200 = vld [vmem:[#allocation4 + $0x3f0] sm:$0xff]
    %v201 = vld [vmem:[#allocation4 + $0x3f8] sm:$0xff]
    %v202 = vld [vmem:[#allocation4 + $0x400] sm:$0xff]
    %v203 = vld [vmem:[#allocation4 + $0x408] sm:$0xff]
    %v204 = vld [vmem:[#allocation4 + $0x410] sm:$0xff]
    %v205 = vld [vmem:[#allocation4 + $0x418] sm:$0xff]
    %v206 = vld [vmem:[#allocation4 + $0x420] sm:$0xff]
    %v207 = vld [vmem:[#allocation4 + $0x428] sm:$0xff]
    %v208 = vld [vmem:[#allocation4 + $0x430] sm:$0xff]
    %v209 = vld [vmem:[#allocation4 + $0x438] sm:$0xff]
    %v210 = vld [vmem:[#allocation4 + $0x440] sm:$0xff]
    %v211 = vld [vmem:[#allocation4 + $0x448] sm:$0xff]
    %v212 = vld [vmem:[#allocation4 + $0x450] sm:$0xff]
    %v213 = vld [vmem:[#allocation4 + $0x458] sm:$0xff]
    %v214 = vld [vmem:[#allocation4 + $0x460] sm:$0xff]
    %v215 = vld [vmem:[#allocation4 + $0x468] sm:$0xff]
    %v216 = vld [vmem:[#allocation4 + $0x470] sm:$0xff]
    %v217 = vld [vmem:[#allocation4 + $0x478] sm:$0xff]
    %v218 = vld [vmem:[#allocation4 + $0x480] sm:$0xff]
    %v219 = vld [vmem:[#allocation4 + $0x488] sm:$0xff]
    %v220 = vld [vmem:[#allocation4 + $0x490] sm:$0xff]
    %v221 = vld [vmem:[#allocation4 + $0x498] sm:$0xff]
    %v222 = vld [vmem:[#allocation4 + $0x4a0] sm:$0xff]
    %v223 = vld [vmem:[#allocation4 + $0x4a8] sm:$0xff]
    %v224 = vld [vmem:[#allocation4 + $0x4b0] sm:$0xff]
    %v225 = vld [vmem:[#allocation4 + $0x4b8] sm:$0xff]
    %v226 = vld [vmem:[#allocation4 + $0x4c0] sm:$0xff]
    %v227 = vld [vmem:[#allocation4 + $0x4c8] sm:$0xff]
    %v228 = vld [vmem:[#allocation4 + $0x4d0] sm:$0xff]
    %v229 = vld [vmem:[#allocation4 + $0x4d8] sm:$0xff]
    %v230 = vld [vmem:[#allocation4 + $0x4e0] sm:$0xff]
    %v231 = vld [vmem:[#allocation4 + $0x4e8] sm:$0xff]
    %v232 = vld [vmem:[#allocation4 + $0x4f0] sm:$0xff]
    %v233 = vld [vmem:[#allocation4 + $0x4f8] sm:$0xff]
    %v234 = vld [vmem:[#allocation4 + $0x500] sm:$0xff]
    %v235 = vld [vmem:[#allocation4 + $0x508] sm:$0xff]
    %v236 = vld [vmem:[#allocation4 + $0x510] sm:$0xff]
    %v237 = vld [vmem:[#allocation4 + $0x518] sm:$0xff]
    %v238 = vld [vmem:[#allocation4 + $0x520] sm:$0xff]
    %v239 = vld [vmem:[#allocation4 + $0x528] sm:$0xff]
    %v240 = vld [vmem:[#allocation4 + $0x530] sm:$0xff]
    %v241 = vld [vmem:[#allocation4 + $0x538] sm:$0xff]
    %v242 = vld [vmem:[#allocation4 + $0x540] sm:$0xff]
    %v243 = vld [vmem:[#allocation4 + $0x548] sm:$0xff]
    %v244 = vld [vmem:[#allocation4 + $0x550] sm:$0xff]
    %v245 = vld [vmem:[#allocation4 + $0x558] sm:$0xff]
    %v246 = vld [vmem:[#allocation4 + $0x560] sm:$0xff]
    %v247 = vld [vmem:[#allocation4 + $0x568] sm:$0xff]
    %v248 = vld [vmem:[#allocation4 + $0x570] sm:$0xff]
    %v249 = vld [vmem:[#allocation4 + $0x578] sm:$0xff]
    %v250 = vld [vmem:[#allocation4 + $0x580] sm:$0xff]
    %v251 = vld [vmem:[#allocation4 + $0x588] sm:$0xff]
    %v252 = vld [vmem:[#allocation4 + $0x590] sm:$0xff]
    %v253 = vld [vmem:[#allocation4 + $0x598] sm:$0xff]
    %v254 = vld [vmem:[#allocation4 + $0x5a0] sm:$0xff]
    %v255 = vld [vmem:[#allocation4 + $0x5a8] sm:$0xff]
    %v256 = vld [vmem:[#allocation4 + $0x5b0] sm:$0xff]
    %v257 = vld [vmem:[#allocation4 + $0x5b8] sm:$0xff]
    %v258 = vld [vmem:[#allocation4 + $0x5c0] sm:$0xff]
    %v259 = vld [vmem:[#allocation4 + $0x5c8] sm:$0xff]
    %v260 = vld [vmem:[#allocation4 + $0x5d0] sm:$0xff]
    %v261 = vld [vmem:[#allocation4 + $0x5d8] sm:$0xff]
    %v262 = vld [vmem:[#allocation4 + $0x5e0] sm:$0xff]
    %v263 = vld [vmem:[#allocation4 + $0x5e8] sm:$0xff]
    %v264 = vld [vmem:[#allocation4 + $0x5f0] sm:$0xff]
    %v265 = vld [vmem:[#allocation4 + $0x5f8] sm:$0xff]
    %267 = vst [vmem:[#allocation1] ss:$9 sm:$0xff] %v73
    %v268 = vld [vmem:[#allocation1] sm:$0xff]
    %v269 = vld [vmem:[#allocation1 + $0x9] sm:$0xff]
    %v270 = vld [vmem:[#allocation1 + $0x12] sm:$0xff]
    %v271 = vld [vmem:[#allocation1 + $0x1b] sm:$0xff]
    %v272 = vld [vmem:[#allocation1 + $0x24] sm:$0xff]
    %v273 = vld [vmem:[#allocation1 + $0x2d] sm:$0xff]
    %v472 = vunpack.c.l.b16 %v74
    %v473 = vunpack.c.h.b16 %v74
    %v474 = vunpack.c.l.b16 %v75
    %v475 = vunpack.c.h.b16 %v75
    %v476 = vunpack.c.l.b16 %v76
    %v477 = vunpack.c.h.b16 %v76
    %v478 = vunpack.c.l.b16 %v77
    %v479 = vunpack.c.h.b16 %v77
    %v480 = vunpack.c.l.b16 %v78
    %v481 = vunpack.c.h.b16 %v78
    %v482 = vunpack.c.l.b16 %v79
    %v483 = vunpack.c.h.b16 %v79
    %v484 = vunpack.c.l.b16 %v80
    %v485 = vunpack.c.h.b16 %v80
    %v486 = vunpack.c.l.b16 %v81
    %v487 = vunpack.c.h.b16 %v81
    %v488 = vunpack.c.l.b16 %v82
    %v489 = vunpack.c.h.b16 %v82
    %v490 = vunpack.c.l.b16 %v83
    %v491 = vunpack.c.h.b16 %v83
    %v492 = vunpack.c.l.b16 %v84
    %v493 = vunpack.c.h.b16 %v84
    %v494 = vunpack.c.l.b16 %v85
    %v495 = vunpack.c.h.b16 %v85
    %v496 = vunpack.c.l.b16 %v86
    %v497 = vunpack.c.h.b16 %v86
    %v498 = vunpack.c.l.b16 %v87
    %v499 = vunpack.c.h.b16 %v87
    %v500 = vunpack.c.l.b16 %v88
    %v501 = vunpack.c.h.b16 %v88
    %v502 = vunpack.c.l.b16 %v89
    %v503 = vunpack.c.h.b16 %v89
    %v504 = vunpack.c.l.b16 %v90
    %v505 = vunpack.c.h.b16 %v90
    %v506 = vunpack.c.l.b16 %v91
    %v507 = vunpack.c.h.b16 %v91
    %v508 = vunpack.c.l.b16 %v92
    %v509 = vunpack.c.h.b16 %v92
    %v510 = vunpack.c.l.b16 %v93
    %v511 = vunpack.c.h.b16 %v93
    %v512 = vunpack.c.l.b16 %v94
    %v513 = vunpack.c.h.b16 %v94
    %v514 = vunpack.c.l.b16 %v95
    %v515 = vunpack.c.h.b16 %v95
    %v516 = vunpack.c.l.b16 %v96
    %v517 = vunpack.c.h.b16 %v96
    %v518 = vunpack.c.l.b16 %v97
    %v519 = vunpack.c.h.b16 %v97
    %v520 = vunpack.c.l.b16 %v98
    %v521 = vunpack.c.h.b16 %v98
    %v522 = vunpack.c.l.b16 %v99
    %v523 = vunpack.c.h.b16 %v99
    %v524 = vunpack.c.l.b16 %v100
    %v525 = vunpack.c.h.b16 %v100
    %v526 = vunpack.c.l.b16 %v101
    %v527 = vunpack.c.h.b16 %v101
    %v528 = vunpack.c.l.b16 %v102
    %v529 = vunpack.c.h.b16 %v102
    %v530 = vunpack.c.l.b16 %v103
    %v531 = vunpack.c.h.b16 %v103
    %v532 = vunpack.c.l.b16 %v104
    %v533 = vunpack.c.h.b16 %v104
    %v534 = vunpack.c.l.b16 %v105
    %v535 = vunpack.c.h.b16 %v105
    %v536 = vunpack.c.l.b16 %v106
    %v537 = vunpack.c.h.b16 %v106
    %v538 = vunpack.c.l.b16 %v107
    %v539 = vunpack.c.h.b16 %v107
    %v540 = vunpack.c.l.b16 %v108
    %v541 = vunpack.c.h.b16 %v108
    %v542 = vunpack.c.l.b16 %v109
    %v543 = vunpack.c.h.b16 %v109
    %v544 = vunpack.c.l.b16 %v110
    %v545 = vunpack.c.h.b16 %v110
    %v546 = vunpack.c.l.b16 %v111
    %v547 = vunpack.c.h.b16 %v111
    %v548 = vunpack.c.l.b16 %v112
    %v549 = vunpack.c.h.b16 %v112
    %v550 = vunpack.c.l.b16 %v113
    %v551 = vunpack.c.h.b16 %v113
    %v552 = vunpack.c.l.b16 %v114
    %v553 = vunpack.c.h.b16 %v114
    %v554 = vunpack.c.l.b16 %v115
    %v555 = vunpack.c.h.b16 %v115
    %v556 = vunpack.c.l.b16 %v116
    %v557 = vunpack.c.h.b16 %v116
    %v558 = vunpack.c.l.b16 %v117
    %v559 = vunpack.c.h.b16 %v117
    %v560 = vunpack.c.l.b16 %v118
    %v561 = vunpack.c.h.b16 %v118
    %v562 = vunpack.c.l.b16 %v119
    %v563 = vunpack.c.h.b16 %v119
    %v564 = vunpack.c.l.b16 %v120
    %v565 = vunpack.c.h.b16 %v120
    %v566 = vunpack.c.l.b16 %v121
    %v567 = vunpack.c.h.b16 %v121
    %v568 = vunpack.c.l.b16 %v122
    %v569 = vunpack.c.h.b16 %v122
    %v570 = vunpack.c.l.b16 %v123
    %v571 = vunpack.c.h.b16 %v123
    %v572 = vunpack.c.l.b16 %v124
    %v573 = vunpack.c.h.b16 %v124
    %v574 = vunpack.c.l.b16 %v125
    %v575 = vunpack.c.h.b16 %v125
    %v576 = vunpack.c.l.b16 %v126
    %v577 = vunpack.c.h.b16 %v126
    %v578 = vunpack.c.l.b16 %v127
    %v579 = vunpack.c.h.b16 %v127
    %v580 = vunpack.c.l.b16 %v128
    %v581 = vunpack.c.h.b16 %v128
    %v582 = vunpack.c.l.b16 %v129
    %v583 = vunpack.c.h.b16 %v129
    %v584 = vunpack.c.l.b16 %v130
    %v585 = vunpack.c.h.b16 %v130
    %v586 = vunpack.c.l.b16 %v131
    %v587 = vunpack.c.h.b16 %v131
    %v588 = vunpack.c.l.b16 %v132
    %v589 = vunpack.c.h.b16 %v132
    %v590 = vunpack.c.l.b16 %v133
    %v591 = vunpack.c.h.b16 %v133
    %v592 = vunpack.c.l.b16 %v134
    %v593 = vunpack.c.h.b16 %v134
    %v594 = vunpack.c.l.b16 %v135
    %v595 = vunpack.c.h.b16 %v135
    %v596 = vunpack.c.l.b16 %v136
    %v597 = vunpack.c.h.b16 %v136
    %v598 = vunpack.c.l.b16 %v137
    %v599 = vunpack.c.h.b16 %v137
    %v600 = vunpack.c.l.b16 %v138
    %v601 = vunpack.c.h.b16 %v138
    %v602 = vunpack.c.l.b16 %v139
    %v603 = vunpack.c.h.b16 %v139
    %v604 = vunpack.c.l.b16 %v140
    %v605 = vunpack.c.h.b16 %v140
    %v606 = vunpack.c.l.b16 %v141
    %v607 = vunpack.c.h.b16 %v141
    %v608 = vunpack.c.l.b16 %v142
    %v609 = vunpack.c.h.b16 %v142
    %v610 = vunpack.c.l.b16 %v143
    %v611 = vunpack.c.h.b16 %v143
    %v612 = vunpack.c.l.b16 %v144
    %v613 = vunpack.c.h.b16 %v144
    %v614 = vunpack.c.l.b16 %v145
    %v615 = vunpack.c.h.b16 %v145
    %v616 = vunpack.c.l.b16 %v146
    %v617 = vunpack.c.h.b16 %v146
    %v618 = vunpack.c.l.b16 %v147
    %v619 = vunpack.c.h.b16 %v147
    %v620 = vunpack.c.l.b16 %v148
    %v621 = vunpack.c.h.b16 %v148
    %v622 = vunpack.c.l.b16 %v149
    %v623 = vunpack.c.h.b16 %v149
    %v624 = vunpack.c.l.b16 %v150
    %v625 = vunpack.c.h.b16 %v150
    %v626 = vunpack.c.l.b16 %v151
    %v627 = vunpack.c.h.b16 %v151
    %v628 = vunpack.c.l.b16 %v152
    %v629 = vunpack.c.h.b16 %v152
    %v630 = vunpack.c.l.b16 %v153
    %v631 = vunpack.c.h.b16 %v153
    %v632 = vunpack.c.l.b16 %v154
    %v633 = vunpack.c.h.b16 %v154
    %v634 = vunpack.c.l.b16 %v155
    %v635 = vunpack.c.h.b16 %v155
    %v636 = vunpack.c.l.b16 %v156
    %v637 = vunpack.c.h.b16 %v156
    %v638 = vunpack.c.l.b16 %v157
    %v639 = vunpack.c.h.b16 %v157
    %v640 = vunpack.c.l.b16 %v158
    %v641 = vunpack.c.h.b16 %v158
    %v642 = vunpack.c.l.b16 %v159
    %v643 = vunpack.c.h.b16 %v159
    %v644 = vunpack.c.l.b16 %v160
    %v645 = vunpack.c.h.b16 %v160
    %v646 = vunpack.c.l.b16 %v161
    %v647 = vunpack.c.h.b16 %v161
    %v648 = vunpack.c.l.b16 %v162
    %v649 = vunpack.c.h.b16 %v162
    %v650 = vunpack.c.l.b16 %v163
    %v651 = vunpack.c.h.b16 %v163
    %v652 = vunpack.c.l.b16 %v164
    %v653 = vunpack.c.h.b16 %v164
    %v654 = vunpack.c.l.b16 %v165
    %v655 = vunpack.c.h.b16 %v165
    %v656 = vunpack.c.l.b16 %v166
    %v657 = vunpack.c.h.b16 %v166
    %v658 = vunpack.c.l.b16 %v167
    %v659 = vunpack.c.h.b16 %v167
    %v660 = vunpack.c.l.b16 %v168
    %v661 = vunpack.c.h.b16 %v168
    %v662 = vunpack.c.l.b16 %v169
    %v663 = vunpack.c.h.b16 %v169
    %v664 = vunpack.c.l.b16 %v170
    %v665 = vunpack.c.h.b16 %v170
    %v666 = vunpack.c.l.b16 %v171
    %v667 = vunpack.c.h.b16 %v171
    %v668 = vunpack.c.l.b16 %v172
    %v669 = vunpack.c.h.b16 %v172
    %v670 = vunpack.c.l.b16 %v173
    %v671 = vunpack.c.h.b16 %v173
    %v672 = vunpack.c.l.b16 %v174
    %v673 = vunpack.c.h.b16 %v174
    %v674 = vunpack.c.l.b16 %v175
    %v675 = vunpack.c.h.b16 %v175
    %v676 = vunpack.c.l.b16 %v176
    %v677 = vunpack.c.h.b16 %v176
    %v678 = vunpack.c.l.b16 %v177
    %v679 = vunpack.c.h.b16 %v177
    %v680 = vunpack.c.l.b16 %v178
    %v681 = vunpack.c.h.b16 %v178
    %v682 = vunpack.c.l.b16 %v179
    %v683 = vunpack.c.h.b16 %v179
    %v684 = vunpack.c.l.b16 %v180
    %v685 = vunpack.c.h.b16 %v180
    %v686 = vunpack.c.l.b16 %v181
    %v687 = vunpack.c.h.b16 %v181
    %v688 = vunpack.c.l.b16 %v182
    %v689 = vunpack.c.h.b16 %v182
    %v690 = vunpack.c.l.b16 %v183
    %v691 = vunpack.c.h.b16 %v183
    %v692 = vunpack.c.l.b16 %v184
    %v693 = vunpack.c.h.b16 %v184
    %v694 = vunpack.c.l.b16 %v185
    %v695 = vunpack.c.h.b16 %v185
    %v696 = vunpack.c.l.b16 %v186
    %v697 = vunpack.c.h.b16 %v186
    %v698 = vunpack.c.l.b16 %v187
    %v699 = vunpack.c.h.b16 %v187
    %v700 = vunpack.c.l.b16 %v188
    %v701 = vunpack.c.h.b16 %v188
    %v702 = vunpack.c.l.b16 %v189
    %v703 = vunpack.c.h.b16 %v189
    %v704 = vunpack.c.l.b16 %v190
    %v705 = vunpack.c.h.b16 %v190
    %v706 = vunpack.c.l.b16 %v191
    %v707 = vunpack.c.h.b16 %v191
    %v708 = vunpack.c.l.b16 %v192
    %v709 = vunpack.c.h.b16 %v192
    %v710 = vunpack.c.l.b16 %v193
    %v711 = vunpack.c.h.b16 %v193
    %v712 = vunpack.c.l.b16 %v194
    %v713 = vunpack.c.h.b16 %v194
    %v714 = vunpack.c.l.b16 %v195
    %v715 = vunpack.c.h.b16 %v195
    %v716 = vunpack.c.l.b16 %v196
    %v717 = vunpack.c.h.b16 %v196
    %v718 = vunpack.c.l.b16 %v197
    %v719 = vunpack.c.h.b16 %v197
    %v720 = vunpack.c.l.b16 %v198
    %v721 = vunpack.c.h.b16 %v198
    %v722 = vunpack.c.l.b16 %v199
    %v723 = vunpack.c.h.b16 %v199
    %v724 = vunpack.c.l.b16 %v200
    %v725 = vunpack.c.h.b16 %v200
    %v726 = vunpack.c.l.b16 %v201
    %v727 = vunpack.c.h.b16 %v201
    %v728 = vunpack.c.l.b16 %v202
    %v729 = vunpack.c.h.b16 %v202
    %v730 = vunpack.c.l.b16 %v203
    %v731 = vunpack.c.h.b16 %v203
    %v732 = vunpack.c.l.b16 %v204
    %v733 = vunpack.c.h.b16 %v204
    %v734 = vunpack.c.l.b16 %v205
    %v735 = vunpack.c.h.b16 %v205
    %v736 = vunpack.c.l.b16 %v206
    %v737 = vunpack.c.h.b16 %v206
    %v738 = vunpack.c.l.b16 %v207
    %v739 = vunpack.c.h.b16 %v207
    %v740 = vunpack.c.l.b16 %v208
    %v741 = vunpack.c.h.b16 %v208
    %v742 = vunpack.c.l.b16 %v209
    %v743 = vunpack.c.h.b16 %v209
    %v744 = vunpack.c.l.b16 %v210
    %v745 = vunpack.c.h.b16 %v210
    %v746 = vunpack.c.l.b16 %v211
    %v747 = vunpack.c.h.b16 %v211
    %v748 = vunpack.c.l.b16 %v212
    %v749 = vunpack.c.h.b16 %v212
    %v750 = vunpack.c.l.b16 %v213
    %v751 = vunpack.c.h.b16 %v213
    %v752 = vunpack.c.l.b16 %v214
    %v753 = vunpack.c.h.b16 %v214
    %v754 = vunpack.c.l.b16 %v215
    %v755 = vunpack.c.h.b16 %v215
    %v756 = vunpack.c.l.b16 %v216
    %v757 = vunpack.c.h.b16 %v216
    %v758 = vunpack.c.l.b16 %v217
    %v759 = vunpack.c.h.b16 %v217
    %v760 = vunpack.c.l.b16 %v218
    %v761 = vunpack.c.h.b16 %v218
    %v762 = vunpack.c.l.b16 %v219
    %v763 = vunpack.c.h.b16 %v219
    %v764 = vunpack.c.l.b16 %v220
    %v765 = vunpack.c.h.b16 %v220
    %v766 = vunpack.c.l.b16 %v221
    %v767 = vunpack.c.h.b16 %v221
    %v768 = vunpack.c.l.b16 %v222
    %v769 = vunpack.c.h.b16 %v222
    %v770 = vunpack.c.l.b16 %v223
    %v771 = vunpack.c.h.b16 %v223
    %v772 = vunpack.c.l.b16 %v224
    %v773 = vunpack.c.h.b16 %v224
    %v774 = vunpack.c.l.b16 %v225
    %v775 = vunpack.c.h.b16 %v225
    %v776 = vunpack.c.l.b16 %v226
    %v777 = vunpack.c.h.b16 %v226
    %v778 = vunpack.c.l.b16 %v227
    %v779 = vunpack.c.h.b16 %v227
    %v780 = vunpack.c.l.b16 %v228
    %v781 = vunpack.c.h.b16 %v228
    %v782 = vunpack.c.l.b16 %v229
    %v783 = vunpack.c.h.b16 %v229
    %v784 = vunpack.c.l.b16 %v230
    %v785 = vunpack.c.h.b16 %v230
    %v786 = vunpack.c.l.b16 %v231
    %v787 = vunpack.c.h.b16 %v231
    %v788 = vunpack.c.l.b16 %v232
    %v789 = vunpack.c.h.b16 %v232
    %v790 = vunpack.c.l.b16 %v233
    %v791 = vunpack.c.h.b16 %v233
    %v792 = vunpack.c.l.b16 %v234
    %v793 = vunpack.c.h.b16 %v234
    %v794 = vunpack.c.l.b16 %v235
    %v795 = vunpack.c.h.b16 %v235
    %v796 = vunpack.c.l.b16 %v236
    %v797 = vunpack.c.h.b16 %v236
    %v798 = vunpack.c.l.b16 %v237
    %v799 = vunpack.c.h.b16 %v237
    %v800 = vunpack.c.l.b16 %v238
    %v801 = vunpack.c.h.b16 %v238
    %v802 = vunpack.c.l.b16 %v239
    %v803 = vunpack.c.h.b16 %v239
    %v804 = vunpack.c.l.b16 %v240
    %v805 = vunpack.c.h.b16 %v240
    %v806 = vunpack.c.l.b16 %v241
    %v807 = vunpack.c.h.b16 %v241
    %v808 = vunpack.c.l.b16 %v242
    %v809 = vunpack.c.h.b16 %v242
    %v810 = vunpack.c.l.b16 %v243
    %v811 = vunpack.c.h.b16 %v243
    %v812 = vunpack.c.l.b16 %v244
    %v813 = vunpack.c.h.b16 %v244
    %v814 = vunpack.c.l.b16 %v245
    %v815 = vunpack.c.h.b16 %v245
    %v816 = vunpack.c.l.b16 %v246
    %v817 = vunpack.c.h.b16 %v246
    %v818 = vunpack.c.l.b16 %v247
    %v819 = vunpack.c.h.b16 %v247
    %v820 = vunpack.c.l.b16 %v248
    %v821 = vunpack.c.h.b16 %v248
    %v822 = vunpack.c.l.b16 %v249
    %v823 = vunpack.c.h.b16 %v249
    %v824 = vunpack.c.l.b16 %v250
    %v825 = vunpack.c.h.b16 %v250
    %v826 = vunpack.c.l.b16 %v251
    %v827 = vunpack.c.h.b16 %v251
    %v828 = vunpack.c.l.b16 %v252
    %v829 = vunpack.c.h.b16 %v252
    %v830 = vunpack.c.l.b16 %v253
    %v831 = vunpack.c.h.b16 %v253
    %v832 = vunpack.c.l.b16 %v254
    %v833 = vunpack.c.h.b16 %v254
    %v834 = vunpack.c.l.b16 %v255
    %v835 = vunpack.c.h.b16 %v255
    %v836 = vunpack.c.l.b16 %v256
    %v837 = vunpack.c.h.b16 %v256
    %v838 = vunpack.c.l.b16 %v257
    %v839 = vunpack.c.h.b16 %v257
    %v840 = vunpack.c.l.b16 %v258
    %v841 = vunpack.c.h.b16 %v258
    %v842 = vunpack.c.l.b16 %v259
    %v843 = vunpack.c.h.b16 %v259
    %v844 = vunpack.c.l.b16 %v260
    %v845 = vunpack.c.h.b16 %v260
    %v846 = vunpack.c.l.b16 %v261
    %v847 = vunpack.c.h.b16 %v261
    %v848 = vunpack.c.l.b16 %v262
    %v849 = vunpack.c.h.b16 %v262
    %v850 = vunpack.c.l.b16 %v263
    %v851 = vunpack.c.h.b16 %v263
    %v852 = vunpack.c.l.b16 %v264
    %v853 = vunpack.c.h.b16 %v264
    %v854 = vunpack.c.l.b16 %v265
    %v855 = vunpack.c.h.b16 %v265
    %v856 = vpack.c.b16 %v476, %v472
    %v857 = vpack.c.b16 %v477, %v473
    %v858 = vpack.c.b16 %v478, %v474
    %v859 = vpack.c.b16 %v479, %v475
    %v860 = vpack.c.b16 %v484, %v480
    %v861 = vpack.c.b16 %v485, %v481
    %v862 = vpack.c.b16 %v486, %v482
    %v863 = vpack.c.b16 %v487, %v483
    %v864 = vpack.c.b16 %v492, %v488
    %v865 = vpack.c.b16 %v493, %v489
    %v866 = vpack.c.b16 %v494, %v490
    %v867 = vpack.c.b16 %v495, %v491
    %v868 = vpack.c.b16 %v500, %v496
    %v869 = vpack.c.b16 %v501, %v497
    %v870 = vpack.c.b16 %v502, %v498
    %v871 = vpack.c.b16 %v503, %v499
    %v872 = vpack.c.b16 %v508, %v504
    %v873 = vpack.c.b16 %v509, %v505
    %v874 = vpack.c.b16 %v510, %v506
    %v875 = vpack.c.b16 %v511, %v507
    %v876 = vpack.c.b16 %v516, %v512
    %v877 = vpack.c.b16 %v517, %v513
    %v878 = vpack.c.b16 %v518, %v514
    %v879 = vpack.c.b16 %v519, %v515
    %v880 = vpack.c.b16 %v524, %v520
    %v881 = vpack.c.b16 %v525, %v521
    %v882 = vpack.c.b16 %v526, %v522
    %v883 = vpack.c.b16 %v527, %v523
    %v884 = vpack.c.b16 %v532, %v528
    %v885 = vpack.c.b16 %v533, %v529
    %v886 = vpack.c.b16 %v534, %v530
    %v887 = vpack.c.b16 %v535, %v531
    %v888 = vpack.c.b16 %v540, %v536
    %v889 = vpack.c.b16 %v541, %v537
    %v890 = vpack.c.b16 %v542, %v538
    %v891 = vpack.c.b16 %v543, %v539
    %v892 = vpack.c.b16 %v548, %v544
    %v893 = vpack.c.b16 %v549, %v545
    %v894 = vpack.c.b16 %v550, %v546
    %v895 = vpack.c.b16 %v551, %v547
    %v896 = vpack.c.b16 %v556, %v552
    %v897 = vpack.c.b16 %v557, %v553
    %v898 = vpack.c.b16 %v558, %v554
    %v899 = vpack.c.b16 %v559, %v555
    %v900 = vpack.c.b16 %v564, %v560
    %v901 = vpack.c.b16 %v565, %v561
    %v902 = vpack.c.b16 %v566, %v562
    %v903 = vpack.c.b16 %v567, %v563
    %v904 = vpack.c.b16 %v572, %v568
    %v905 = vpack.c.b16 %v573, %v569
    %v906 = vpack.c.b16 %v574, %v570
    %v907 = vpack.c.b16 %v575, %v571
    %v908 = vpack.c.b16 %v580, %v576
    %v909 = vpack.c.b16 %v581, %v577
    %v910 = vpack.c.b16 %v582, %v578
    %v911 = vpack.c.b16 %v583, %v579
    %v912 = vpack.c.b16 %v588, %v584
    %v913 = vpack.c.b16 %v589, %v585
    %v914 = vpack.c.b16 %v590, %v586
    %v915 = vpack.c.b16 %v591, %v587
    %v916 = vpack.c.b16 %v596, %v592
    %v917 = vpack.c.b16 %v597, %v593
    %v918 = vpack.c.b16 %v598, %v594
    %v919 = vpack.c.b16 %v599, %v595
    %v920 = vpack.c.b16 %v604, %v600
    %v921 = vpack.c.b16 %v605, %v601
    %v922 = vpack.c.b16 %v606, %v602
    %v923 = vpack.c.b16 %v607, %v603
    %v924 = vpack.c.b16 %v612, %v608
    %v925 = vpack.c.b16 %v613, %v609
    %v926 = vpack.c.b16 %v614, %v610
    %v927 = vpack.c.b16 %v615, %v611
    %v928 = vpack.c.b16 %v620, %v616
    %v929 = vpack.c.b16 %v621, %v617
    %v930 = vpack.c.b16 %v622, %v618
    %v931 = vpack.c.b16 %v623, %v619
    %v932 = vpack.c.b16 %v628, %v624
    %v933 = vpack.c.b16 %v629, %v625
    %v934 = vpack.c.b16 %v630, %v626
    %v935 = vpack.c.b16 %v631, %v627
    %v936 = vpack.c.b16 %v636, %v632
    %v937 = vpack.c.b16 %v637, %v633
    %v938 = vpack.c.b16 %v638, %v634
    %v939 = vpack.c.b16 %v639, %v635
    %v940 = vpack.c.b16 %v644, %v640
    %v941 = vpack.c.b16 %v645, %v641
    %v942 = vpack.c.b16 %v646, %v642
    %v943 = vpack.c.b16 %v647, %v643
    %v944 = vpack.c.b16 %v652, %v648
    %v945 = vpack.c.b16 %v653, %v649
    %v946 = vpack.c.b16 %v654, %v650
    %v947 = vpack.c.b16 %v655, %v651
    %v948 = vpack.c.b16 %v660, %v656
    %v949 = vpack.c.b16 %v661, %v657
    %v950 = vpack.c.b16 %v662, %v658
    %v951 = vpack.c.b16 %v663, %v659
    %v952 = vpack.c.b16 %v668, %v664
    %v953 = vpack.c.b16 %v669, %v665
    %v954 = vpack.c.b16 %v670, %v666
    %v955 = vpack.c.b16 %v671, %v667
    %v956 = vpack.c.b16 %v676, %v672
    %v957 = vpack.c.b16 %v677, %v673
    %v958 = vpack.c.b16 %v678, %v674
    %v959 = vpack.c.b16 %v679, %v675
    %v960 = vpack.c.b16 %v684, %v680
    %v961 = vpack.c.b16 %v685, %v681
    %v962 = vpack.c.b16 %v686, %v682
    %v963 = vpack.c.b16 %v687, %v683
    %v964 = vpack.c.b16 %v692, %v688
    %v965 = vpack.c.b16 %v693, %v689
    %v966 = vpack.c.b16 %v694, %v690
    %v967 = vpack.c.b16 %v695, %v691
    %v968 = vpack.c.b16 %v700, %v696
    %v969 = vpack.c.b16 %v701, %v697
    %v970 = vpack.c.b16 %v702, %v698
    %v971 = vpack.c.b16 %v703, %v699
    %v972 = vpack.c.b16 %v708, %v704
    %v973 = vpack.c.b16 %v709, %v705
    %v974 = vpack.c.b16 %v710, %v706
    %v975 = vpack.c.b16 %v711, %v707
    %v976 = vpack.c.b16 %v716, %v712
    %v977 = vpack.c.b16 %v717, %v713
    %v978 = vpack.c.b16 %v718, %v714
    %v979 = vpack.c.b16 %v719, %v715
    %v980 = vpack.c.b16 %v724, %v720
    %v981 = vpack.c.b16 %v725, %v721
    %v982 = vpack.c.b16 %v726, %v722
    %v983 = vpack.c.b16 %v727, %v723
    %v984 = vpack.c.b16 %v732, %v728
    %v985 = vpack.c.b16 %v733, %v729
    %v986 = vpack.c.b16 %v734, %v730
    %v987 = vpack.c.b16 %v735, %v731
    %v988 = vpack.c.b16 %v740, %v736
    %v989 = vpack.c.b16 %v741, %v737
    %v990 = vpack.c.b16 %v742, %v738
    %v991 = vpack.c.b16 %v743, %v739
    %v992 = vpack.c.b16 %v748, %v744
    %v993 = vpack.c.b16 %v749, %v745
    %v994 = vpack.c.b16 %v750, %v746
    %v995 = vpack.c.b16 %v751, %v747
    %v996 = vpack.c.b16 %v756, %v752
    %v997 = vpack.c.b16 %v757, %v753
    %v998 = vpack.c.b16 %v758, %v754
    %v999 = vpack.c.b16 %v759, %v755
    %v1000 = vpack.c.b16 %v764, %v760
    %v1001 = vpack.c.b16 %v765, %v761
    %v1002 = vpack.c.b16 %v766, %v762
    %v1003 = vpack.c.b16 %v767, %v763
    %v1004 = vpack.c.b16 %v772, %v768
    %v1005 = vpack.c.b16 %v773, %v769
    %v1006 = vpack.c.b16 %v774, %v770
    %v1007 = vpack.c.b16 %v775, %v771
    %v1008 = vpack.c.b16 %v780, %v776
    %v1009 = vpack.c.b16 %v781, %v777
    %v1010 = vpack.c.b16 %v782, %v778
    %v1011 = vpack.c.b16 %v783, %v779
    %v1012 = vpack.c.b16 %v788, %v784
    %v1013 = vpack.c.b16 %v789, %v785
    %v1014 = vpack.c.b16 %v790, %v786
    %v1015 = vpack.c.b16 %v791, %v787
    %v1016 = vpack.c.b16 %v796, %v792
    %v1017 = vpack.c.b16 %v797, %v793
    %v1018 = vpack.c.b16 %v798, %v794
    %v1019 = vpack.c.b16 %v799, %v795
    %v1020 = vpack.c.b16 %v804, %v800
    %v1021 = vpack.c.b16 %v805, %v801
    %v1022 = vpack.c.b16 %v806, %v802
    %v1023 = vpack.c.b16 %v807, %v803
    %v1024 = vpack.c.b16 %v812, %v808
    %v1025 = vpack.c.b16 %v813, %v809
    %v1026 = vpack.c.b16 %v814, %v810
    %v1027 = vpack.c.b16 %v815, %v811
    %v1028 = vpack.c.b16 %v820, %v816
    %v1029 = vpack.c.b16 %v821, %v817
    %v1030 = vpack.c.b16 %v822, %v818
    %v1031 = vpack.c.b16 %v823, %v819
    %v1032 = vpack.c.b16 %v828, %v824
    %v1033 = vpack.c.b16 %v829, %v825
    %v1034 = vpack.c.b16 %v830, %v826
    %v1035 = vpack.c.b16 %v831, %v827
    %v1036 = vpack.c.b16 %v836, %v832
    %v1037 = vpack.c.b16 %v837, %v833
    %v1038 = vpack.c.b16 %v838, %v834
    %v1039 = vpack.c.b16 %v839, %v835
    %v1040 = vpack.c.b16 %v844, %v840
    %v1041 = vpack.c.b16 %v845, %v841
    %v1042 = vpack.c.b16 %v846, %v842
    %v1043 = vpack.c.b16 %v847, %v843
    %v1044 = vpack.c.b16 %v852, %v848
    %v1045 = vpack.c.b16 %v853, %v849
    %v1046 = vpack.c.b16 %v854, %v850
    %v1047 = vpack.c.b16 %v855, %v851
    %1240 = vmatpush.bf16.msra.mxu0 %v884
    %1241 = vmatpush.bf16.msra.mxu0 %v880
    %1242 = vmatpush.bf16.msra.mxu0 %v876
    %1243 = vmatpush.bf16.msra.mxu0 %v872
    %1244 = vmatpush.bf16.msra.mxu0 %v868
    %1245 = vmatpush.bf16.msra.mxu0 %v864
    %1246 = vmatpush.bf16.msra.mxu0 %v860
    %1247 = vmatpush.bf16.msra.mxu0 %v856
    %1248 = vmatmul.bf16.gmra.mxu0 %v268
    %v1249 = vpop.f32.mrf.mxu0
    %v1250 = vadd.f32 0.0, %v1249
    %v1251 = vpop.f32.mrf.mxu0
    %1252 = vdwg.mxu0
    %1253 = vmatpush.bf16.msra.mxu0 %v916
    %1254 = vmatpush.bf16.msra.mxu0 %v912
    %1255 = vmatpush.bf16.msra.mxu0 %v908
    %1256 = vmatpush.bf16.msra.mxu0 %v904
    %1257 = vmatpush.bf16.msra.mxu0 %v900
    %1258 = vmatpush.bf16.msra.mxu0 %v896
    %1259 = vmatpush.bf16.msra.mxu0 %v892
    %1260 = vmatpush.bf16.msra.mxu0 %v888
    %1261 = vmatmul.bf16.gmra.mxu0 %v269
    %v1262 = vpop.f32.mrf.mxu0
    %v1263 = vadd.f32 %v1250, %v1262
    %v1264 = vpop.f32.mrf.mxu0
    %1265 = vdwg.mxu0
    %1266 = vmatpush.bf16.msra.mxu0 %v948
    %1267 = vmatpush.bf16.msra.mxu0 %v944
    %1268 = vmatpush.bf16.msra.mxu0 %v940
    %1269 = vmatpush.bf16.msra.mxu0 %v936
    %1270 = vmatpush.bf16.msra.mxu0 %v932
    %1271 = vmatpush.bf16.msra.mxu0 %v928
    %1272 = vmatpush.bf16.msra.mxu0 %v924
    %1273 = vmatpush.bf16.msra.mxu0 %v920
    %1274 = vmatmul.bf16.gmra.mxu0 %v270
    %v1275 = vpop.f32.mrf.mxu0
    %v1276 = vadd.f32 %v1263, %v1275
    %v1277 = vpop.f32.mrf.mxu0
    %1278 = vdwg.mxu0
    %1279 = vmatpush.bf16.msra.mxu0 %v980
    %1280 = vmatpush.bf16.msra.mxu0 %v976
    %1281 = vmatpush.bf16.msra.mxu0 %v972
    %1282 = vmatpush.bf16.msra.mxu0 %v968
    %1283 = vmatpush.bf16.msra.mxu0 %v964
    %1284 = vmatpush.bf16.msra.mxu0 %v960
    %1285 = vmatpush.bf16.msra.mxu0 %v956
    %1286 = vmatpush.bf16.msra.mxu0 %v952
    %1287 = vmatmul.bf16.gmra.mxu0 %v271
    %v1288 = vpop.f32.mrf.mxu0
    %v1289 = vadd.f32 %v1276, %v1288
    %v1290 = vpop.f32.mrf.mxu0
    %1291 = vdwg.mxu0
    %1292 = vmatpush.bf16.msra.mxu0 %v1012
    %1293 = vmatpush.bf16.msra.mxu0 %v1008
    %1294 = vmatpush.bf16.msra.mxu0 %v1004
    %1295 = vmatpush.bf16.msra.mxu0 %v1000
    %1296 = vmatpush.bf16.msra.mxu0 %v996
    %1297 = vmatpush.bf16.msra.mxu0 %v992
    %1298 = vmatpush.bf16.msra.mxu0 %v988
    %1299 = vmatpush.bf16.msra.mxu0 %v984
    %1300 = vmatmul.bf16.gmra.mxu0 %v272
    %v1301 = vpop.f32.mrf.mxu0
    %v1302 = vadd.f32 %v1289, %v1301
    %v1303 = vpop.f32.mrf.mxu0
    %1304 = vdwg.mxu0
    %1305 = vmatpush.bf16.msra.mxu0 %v1044
    %1306 = vmatpush.bf16.msra.mxu0 %v1040
    %1307 = vmatpush.bf16.msra.mxu0 %v1036
    %1308 = vmatpush.bf16.msra.mxu0 %v1032
    %1309 = vmatpush.bf16.msra.mxu0 %v1028
    %1310 = vmatpush.bf16.msra.mxu0 %v1024
    %1311 = vmatpush.bf16.msra.mxu0 %v1020
    %1312 = vmatpush.bf16.msra.mxu0 %v1016
    %1313 = vmatmul.bf16.gmra.mxu0 %v273
    %v1314 = vpop.f32.mrf.mxu0
    %v1315 = vadd.f32 %v1302, %v1314
    %v1316 = vpop.f32.mrf.mxu0
    %1317 = vdwg.mxu0
    %1318 = vmatpush.bf16.msra.mxu0 %v885
    %1319 = vmatpush.bf16.msra.mxu0 %v881
    %1320 = vmatpush.bf16.msra.mxu0 %v877
    %1321 = vmatpush.bf16.msra.mxu0 %v873
    %1322 = vmatpush.bf16.msra.mxu0 %v869
    %1323 = vmatpush.bf16.msra.mxu0 %v865
    %1324 = vmatpush.bf16.msra.mxu0 %v861
    %1325 = vmatpush.bf16.msra.mxu0 %v857
    %1326 = vmatmul.bf16.gmra.mxu0 %v268
    %v1327 = vpop.f32.mrf.mxu0
    %v1328 = vadd.f32 0.0, %v1327
    %v1329 = vpop.f32.mrf.mxu0
    %1330 = vdwg.mxu0
    %1331 = vmatpush.bf16.msra.mxu0 %v917
    %1332 = vmatpush.bf16.msra.mxu0 %v913
    %1333 = vmatpush.bf16.msra.mxu0 %v909
    %1334 = vmatpush.bf16.msra.mxu0 %v905
    %1335 = vmatpush.bf16.msra.mxu0 %v901
    %1336 = vmatpush.bf16.msra.mxu0 %v897
    %1337 = vmatpush.bf16.msra.mxu0 %v893
    %1338 = vmatpush.bf16.msra.mxu0 %v889
    %1339 = vmatmul.bf16.gmra.mxu0 %v269
    %v1340 = vpop.f32.mrf.mxu0
    %v1341 = vadd.f32 %v1328, %v1340
    %v1342 = vpop.f32.mrf.mxu0
    %1343 = vdwg.mxu0
    %1344 = vmatpush.bf16.msra.mxu0 %v949
    %1345 = vmatpush.bf16.msra.mxu0 %v945
    %1346 = vmatpush.bf16.msra.mxu0 %v941
    %1347 = vmatpush.bf16.msra.mxu0 %v937
    %1348 = vmatpush.bf16.msra.mxu0 %v933
    %1349 = vmatpush.bf16.msra.mxu0 %v929
    %1350 = vmatpush.bf16.msra.mxu0 %v925
    %1351 = vmatpush.bf16.msra.mxu0 %v921
    %1352 = vmatmul.bf16.gmra.mxu0 %v270
    %v1353 = vpop.f32.mrf.mxu0
    %v1354 = vadd.f32 %v1341, %v1353
    %v1355 = vpop.f32.mrf.mxu0
    %1356 = vdwg.mxu0
    %1357 = vmatpush.bf16.msra.mxu0 %v981
    %1358 = vmatpush.bf16.msra.mxu0 %v977
    %1359 = vmatpush.bf16.msra.mxu0 %v973
    %1360 = vmatpush.bf16.msra.mxu0 %v969
    %1361 = vmatpush.bf16.msra.mxu0 %v965
    %1362 = vmatpush.bf16.msra.mxu0 %v961
    %1363 = vmatpush.bf16.msra.mxu0 %v957
    %1364 = vmatpush.bf16.msra.mxu0 %v953
    %1365 = vmatmul.bf16.gmra.mxu0 %v271
    %v1366 = vpop.f32.mrf.mxu0
    %v1367 = vadd.f32 %v1354, %v1366
    %v1368 = vpop.f32.mrf.mxu0
    %1369 = vdwg.mxu0
    %1370 = vmatpush.bf16.msra.mxu0 %v1013
    %1371 = vmatpush.bf16.msra.mxu0 %v1009
    %1372 = vmatpush.bf16.msra.mxu0 %v1005
    %1373 = vmatpush.bf16.msra.mxu0 %v1001
    %1374 = vmatpush.bf16.msra.mxu0 %v997
    %1375 = vmatpush.bf16.msra.mxu0 %v993
    %1376 = vmatpush.bf16.msra.mxu0 %v989
    %1377 = vmatpush.bf16.msra.mxu0 %v985
    %1378 = vmatmul.bf16.gmra.mxu0 %v272
    %v1379 = vpop.f32.mrf.mxu0
    %v1380 = vadd.f32 %v1367, %v1379
    %v1381 = vpop.f32.mrf.mxu0
    %1382 = vdwg.mxu0
    %1383 = vmatpush.bf16.msra.mxu0 %v1045
    %1384 = vmatpush.bf16.msra.mxu0 %v1041
    %1385 = vmatpush.bf16.msra.mxu0 %v1037
    %1386 = vmatpush.bf16.msra.mxu0 %v1033
    %1387 = vmatpush.bf16.msra.mxu0 %v1029
    %1388 = vmatpush.bf16.msra.mxu0 %v1025
    %1389 = vmatpush.bf16.msra.mxu0 %v1021
    %1390 = vmatpush.bf16.msra.mxu0 %v1017
    %1391 = vmatmul.bf16.gmra.mxu0 %v273
    %v1392 = vpop.f32.mrf.mxu0
    %v1393 = vadd.f32 %v1380, %v1392
    %v1394 = vpop.f32.mrf.mxu0
    %1395 = vdwg.mxu0
    %1396 = vmatpush.bf16.msra.mxu0 %v886
    %1397 = vmatpush.bf16.msra.mxu0 %v882
    %1398 = vmatpush.bf16.msra.mxu0 %v878
    %1399 = vmatpush.bf16.msra.mxu0 %v874
    %1400 = vmatpush.bf16.msra.mxu0 %v870
    %1401 = vmatpush.bf16.msra.mxu0 %v866
    %1402 = vmatpush.bf16.msra.mxu0 %v862
    %1403 = vmatpush.bf16.msra.mxu0 %v858
    %1404 = vmatmul.bf16.gmra.mxu0 %v268
    %v1405 = vpop.f32.mrf.mxu0
    %v1406 = vadd.f32 0.0, %v1405
    %v1407 = vpop.f32.mrf.mxu0
    %1408 = vdwg.mxu0
    %1409 = vmatpush.bf16.msra.mxu0 %v918
    %1410 = vmatpush.bf16.msra.mxu0 %v914
    %1411 = vmatpush.bf16.msra.mxu0 %v910
    %1412 = vmatpush.bf16.msra.mxu0 %v906
    %1413 = vmatpush.bf16.msra.mxu0 %v902
    %1414 = vmatpush.bf16.msra.mxu0 %v898
    %1415 = vmatpush.bf16.msra.mxu0 %v894
    %1416 = vmatpush.bf16.msra.mxu0 %v890
    %1417 = vmatmul.bf16.gmra.mxu0 %v269
    %v1418 = vpop.f32.mrf.mxu0
    %v1419 = vadd.f32 %v1406, %v1418
    %v1420 = vpop.f32.mrf.mxu0
    %1421 = vdwg.mxu0
    %1422 = vmatpush.bf16.msra.mxu0 %v950
    %1423 = vmatpush.bf16.msra.mxu0 %v946
    %1424 = vmatpush.bf16.msra.mxu0 %v942
    %1425 = vmatpush.bf16.msra.mxu0 %v938
    %1426 = vmatpush.bf16.msra.mxu0 %v934
    %1427 = vmatpush.bf16.msra.mxu0 %v930
    %1428 = vmatpush.bf16.msra.mxu0 %v926
    %1429 = vmatpush.bf16.msra.mxu0 %v922
    %1430 = vmatmul.bf16.gmra.mxu0 %v270
    %v1431 = vpop.f32.mrf.mxu0
    %v1432 = vadd.f32 %v1419, %v1431
    %v1433 = vpop.f32.mrf.mxu0
    %1434 = vdwg.mxu0
    %1435 = vmatpush.bf16.msra.mxu0 %v982
    %1436 = vmatpush.bf16.msra.mxu0 %v978
    %1437 = vmatpush.bf16.msra.mxu0 %v974
    %1438 = vmatpush.bf16.msra.mxu0 %v970
    %1439 = vmatpush.bf16.msra.mxu0 %v966
    %1440 = vmatpush.bf16.msra.mxu0 %v962
    %1441 = vmatpush.bf16.msra.mxu0 %v958
    %1442 = vmatpush.bf16.msra.mxu0 %v954
    %1443 = vmatmul.bf16.gmra.mxu0 %v271
    %v1444 = vpop.f32.mrf.mxu0
    %v1445 = vadd.f32 %v1432, %v1444
    %v1446 = vpop.f32.mrf.mxu0
    %1447 = vdwg.mxu0
    %1448 = vmatpush.bf16.msra.mxu0 %v1014
    %1449 = vmatpush.bf16.msra.mxu0 %v1010
    %1450 = vmatpush.bf16.msra.mxu0 %v1006
    %1451 = vmatpush.bf16.msra.mxu0 %v1002
    %1452 = vmatpush.bf16.msra.mxu0 %v998
    %1453 = vmatpush.bf16.msra.mxu0 %v994
    %1454 = vmatpush.bf16.msra.mxu0 %v990
    %1455 = vmatpush.bf16.msra.mxu0 %v986
    %1456 = vmatmul.bf16.gmra.mxu0 %v272
    %v1457 = vpop.f32.mrf.mxu0
    %v1458 = vadd.f32 %v1445, %v1457
    %v1459 = vpop.f32.mrf.mxu0
    %1460 = vdwg.mxu0
    %1461 = vmatpush.bf16.msra.mxu0 %v1046
    %1462 = vmatpush.bf16.msra.mxu0 %v1042
    %1463 = vmatpush.bf16.msra.mxu0 %v1038
    %1464 = vmatpush.bf16.msra.mxu0 %v1034
    %1465 = vmatpush.bf16.msra.mxu0 %v1030
    %1466 = vmatpush.bf16.msra.mxu0 %v1026
    %1467 = vmatpush.bf16.msra.mxu0 %v1022
    %1468 = vmatpush.bf16.msra.mxu0 %v1018
    %1469 = vmatmul.bf16.gmra.mxu0 %v273
    %v1470 = vpop.f32.mrf.mxu0
    %v1471 = vadd.f32 %v1458, %v1470
    %v1472 = vpop.f32.mrf.mxu0
    %1473 = vdwg.mxu0
    %1474 = vmatpush.bf16.msra.mxu0 %v887
    %1475 = vmatpush.bf16.msra.mxu0 %v883
    %1476 = vmatpush.bf16.msra.mxu0 %v879
    %1477 = vmatpush.bf16.msra.mxu0 %v875
    %1478 = vmatpush.bf16.msra.mxu0 %v871
    %1479 = vmatpush.bf16.msra.mxu0 %v867
    %1480 = vmatpush.bf16.msra.mxu0 %v863
    %1481 = vmatpush.bf16.msra.mxu0 %v859
    %1482 = vmatmul.bf16.gmra.mxu0 %v268
    %v1483 = vpop.f32.mrf.mxu0
    %v1484 = vadd.f32 0.0, %v1483
    %v1485 = vpop.f32.mrf.mxu0
    %1486 = vdwg.mxu0
    %1487 = vmatpush.bf16.msra.mxu0 %v919
    %1488 = vmatpush.bf16.msra.mxu0 %v915
    %1489 = vmatpush.bf16.msra.mxu0 %v911
    %1490 = vmatpush.bf16.msra.mxu0 %v907
    %1491 = vmatpush.bf16.msra.mxu0 %v903
    %1492 = vmatpush.bf16.msra.mxu0 %v899
    %1493 = vmatpush.bf16.msra.mxu0 %v895
    %1494 = vmatpush.bf16.msra.mxu0 %v891
    %1495 = vmatmul.bf16.gmra.mxu0 %v269
    %v1496 = vpop.f32.mrf.mxu0
    %v1497 = vadd.f32 %v1484, %v1496
    %v1498 = vpop.f32.mrf.mxu0
    %1499 = vdwg.mxu0
    %1500 = vmatpush.bf16.msra.mxu0 %v951
    %1501 = vmatpush.bf16.msra.mxu0 %v947
    %1502 = vmatpush.bf16.msra.mxu0 %v943
    %1503 = vmatpush.bf16.msra.mxu0 %v939
    %1504 = vmatpush.bf16.msra.mxu0 %v935
    %1505 = vmatpush.bf16.msra.mxu0 %v931
    %1506 = vmatpush.bf16.msra.mxu0 %v927
    %1507 = vmatpush.bf16.msra.mxu0 %v923
    %1508 = vmatmul.bf16.gmra.mxu0 %v270
    %v1509 = vpop.f32.mrf.mxu0
    %v1510 = vadd.f32 %v1497, %v1509
    %v1511 = vpop.f32.mrf.mxu0
    %1512 = vdwg.mxu0
    %1513 = vmatpush.bf16.msra.mxu0 %v983
    %1514 = vmatpush.bf16.msra.mxu0 %v979
    %1515 = vmatpush.bf16.msra.mxu0 %v975
    %1516 = vmatpush.bf16.msra.mxu0 %v971
    %1517 = vmatpush.bf16.msra.mxu0 %v967
    %1518 = vmatpush.bf16.msra.mxu0 %v963
    %1519 = vmatpush.bf16.msra.mxu0 %v959
    %1520 = vmatpush.bf16.msra.mxu0 %v955
    %1521 = vmatmul.bf16.gmra.mxu0 %v271
    %v1522 = vpop.f32.mrf.mxu0
    %v1523 = vadd.f32 %v1510, %v1522
    %v1524 = vpop.f32.mrf.mxu0
    %1525 = vdwg.mxu0
    %1526 = vmatpush.bf16.msra.mxu0 %v1015
    %1527 = vmatpush.bf16.msra.mxu0 %v1011
    %1528 = vmatpush.bf16.msra.mxu0 %v1007
    %1529 = vmatpush.bf16.msra.mxu0 %v1003
    %1530 = vmatpush.bf16.msra.mxu0 %v999
    %1531 = vmatpush.bf16.msra.mxu0 %v995
    %1532 = vmatpush.bf16.msra.mxu0 %v991
    %1533 = vmatpush.bf16.msra.mxu0 %v987
    %1534 = vmatmul.bf16.gmra.mxu0 %v272
    %v1535 = vpop.f32.mrf.mxu0
    %v1536 = vadd.f32 %v1523, %v1535
    %v1537 = vpop.f32.mrf.mxu0
    %1538 = vdwg.mxu0
    %1539 = vmatpush.bf16.msra.mxu0 %v1047
    %1540 = vmatpush.bf16.msra.mxu0 %v1043
    %1541 = vmatpush.bf16.msra.mxu0 %v1039
    %1542 = vmatpush.bf16.msra.mxu0 %v1035
    %1543 = vmatpush.bf16.msra.mxu0 %v1031
    %1544 = vmatpush.bf16.msra.mxu0 %v1027
    %1545 = vmatpush.bf16.msra.mxu0 %v1023
    %1546 = vmatpush.bf16.msra.mxu0 %v1019
    %1547 = vmatmul.bf16.gmra.mxu0 %v273
    %v1548 = vpop.f32.mrf.mxu0
    %v1549 = vadd.f32 %v1536, %v1548
    %v1550 = vpop.f32.mrf.mxu0
    %1551 = vdwg.mxu0
    %v1556 = vrot.slane %v1393, 6
    %v1557 = vrot.slane %v1471, 4
    %v1558 = vrot.slane %v1549, 2
    %vm1559 = vcmask 1041408
    %v1560 = vsel %vm1559, %v1315, %v1556
    %vm1561 = vcmask 1045508
    %v1562 = vsel %vm1561, %v1557, %v1558
    %vm1563 = vcmask 1043456
    %v1564 = vsel %vm1563, %v1560, %v1562
    %v1566 = vadd.f32 %v72, %v1564
    %1567 = vst [vmem:[#allocation2] sm:$0xff] %v1566
    // Predicated region
    $region50: #{tpu_custom_call.1} parent=1 // pred_check
      %p1568 = pneg %p67
    $region51: #{tpu_custom_call.1} parent=1 // pred_check_branch
      %1570 = sbr.rel (%p1568) target = $region53
    $region52: #{tpu_custom_call.1} parent=1 // pred_region
      %v1571 = vld [vmem:[#allocation2] sm:$0xff]
      %v1572 = vld [vmem:[%s2] sm:$0x1]
      %v1573 = vld [vmem:[%s3] sm:$0xff]
      %v1574 = vld [vmem:[%s3 + $0x8] sm:$0xff]
      %v1575 = vld [vmem:[%s3 + $0x10] sm:$0xff]
      %v1576 = vld [vmem:[%s3 + $0x18] sm:$0xff]
      %v1577 = vld [vmem:[%s3 + $0x20] sm:$0xff]
      %v1578 = vld [vmem:[%s3 + $0x28] sm:$0xff]
      %v1579 = vld [vmem:[%s3 + $0x30] sm:$0xff]
      %v1580 = vld [vmem:[%s3 + $0x38] sm:$0xff]
      %v1589 = vunpack.c.l.b16 %v1573
      %v1590 = vunpack.c.h.b16 %v1573
      %v1591 = vunpack.c.l.b16 %v1574
      %v1592 = vunpack.c.h.b16 %v1574
      %v1593 = vunpack.c.l.b16 %v1575
      %v1594 = vunpack.c.h.b16 %v1575
      %v1595 = vunpack.c.l.b16 %v1576
      %v1596 = vunpack.c.h.b16 %v1576
      %v1597 = vunpack.c.l.b16 %v1577
      %v1598 = vunpack.c.h.b16 %v1577
      %v1599 = vunpack.c.l.b16 %v1578
      %v1600 = vunpack.c.h.b16 %v1578
      %v1601 = vunpack.c.l.b16 %v1579
      %v1602 = vunpack.c.h.b16 %v1579
      %v1603 = vunpack.c.l.b16 %v1580
      %v1604 = vunpack.c.h.b16 %v1580
      %v1605 = vpack.c.b16 %v1593, %v1589
      %v1606 = vpack.c.b16 %v1594, %v1590
      %v1607 = vpack.c.b16 %v1595, %v1591
      %v1608 = vpack.c.b16 %v1596, %v1592
      %v1609 = vpack.c.b16 %v1601, %v1597
      %v1610 = vpack.c.b16 %v1602, %v1598
      %v1611 = vpack.c.b16 %v1603, %v1599
      %v1612 = vpack.c.b16 %v1604, %v1600
      %vm1621 = vcmask 261120
      %v1623 = vsel %vm1621, %v1572, 0
      %1625 = vmatpush.bf16.msra.mxu0 0
      %1626 = vmatpush.bf16.msra.mxu0 0
      %1627 = vmatpush.bf16.msra.mxu0 0
      %1628 = vmatpush.bf16.msra.mxu0 0
      %1629 = vmatpush.bf16.msra.mxu0 0
      %1630 = vmatpush.bf16.msra.mxu0 0
      %1631 = vmatpush.bf16.msra.mxu0 %v1609
      %1632 = vmatpush.bf16.msra.mxu0 %v1605
      %1633 = vmatmul.bf16.gmra.mxu0 %v1623
      %v1634 = vpop.f32.mrf.mxu0
      %v1635 = vadd.f32 0.0, %v1634
      %v1636 = vpop.f32.mrf.mxu0
      %1637 = vdwg.mxu0
      %1638 = vmatpush.bf16.msra.mxu0 0
      %1639 = vmatpush.bf16.msra.mxu0 0
      %1640 = vmatpush.bf16.msra.mxu0 0
      %1641 = vmatpush.bf16.msra.mxu0 0
      %1642 = vmatpush.bf16.msra.mxu0 0
      %1643 = vmatpush.bf16.msra.mxu0 0
      %1644 = vmatpush.bf16.msra.mxu0 %v1610
      %1645 = vmatpush.bf16.msra.mxu0 %v1606
      %1646 = vmatmul.bf16.gmra.mxu0 %v1623
      %v1647 = vpop.f32.mrf.mxu0
      %v1648 = vadd.f32 0.0, %v1647
      %v1649 = vpop.f32.mrf.mxu0
      %1650 = vdwg.mxu0
      %1651 = vmatpush.bf16.msra.mxu0 0
      %1652 = vmatpush.bf16.msra.mxu0 0
      %1653 = vmatpush.bf16.msra.mxu0 0
      %1654 = vmatpush.bf16.msra.mxu0 0
      %1655 = vmatpush.bf16.msra.mxu0 0
      %1656 = vmatpush.bf16.msra.mxu0 0
      %1657 = vmatpush.bf16.msra.mxu0 %v1611
      %1658 = vmatpush.bf16.msra.mxu0 %v1607
      %1659 = vmatmul.bf16.gmra.mxu0 %v1623
      %v1660 = vpop.f32.mrf.mxu0
      %v1661 = vadd.f32 0.0, %v1660
      %v1662 = vpop.f32.mrf.mxu0
      %1663 = vdwg.mxu0
      %1664 = vmatpush.bf16.msra.mxu0 0
      %1665 = vmatpush.bf16.msra.mxu0 0
      %1666 = vmatpush.bf16.msra.mxu0 0
      %1667 = vmatpush.bf16.msra.mxu0 0
      %1668 = vmatpush.bf16.msra.mxu0 0
      %1669 = vmatpush.bf16.msra.mxu0 0
      %1670 = vmatpush.bf16.msra.mxu0 %v1612
      %1671 = vmatpush.bf16.msra.mxu0 %v1608
      %1672 = vmatmul.bf16.gmra.mxu0 %v1623
      %v1673 = vpop.f32.mrf.mxu0
      %v1674 = vadd.f32 0.0, %v1673
      %v1675 = vpop.f32.mrf.mxu0
      %1676 = vdwg.mxu0
      %v1681 = vrot.slane %v1648, 6
      %v1682 = vrot.slane %v1661, 4
      %v1683 = vrot.slane %v1674, 2
      %v1684 = vsel %vm1559, %v1635, %v1681
      %v1685 = vsel %vm1561, %v1682, %v1683
      %v1686 = vsel %vm1563, %v1684, %v1685
      %v1688 = vadd.f32 %v1571, %v1686
      %v1689 = vld [vmem:[%s4] sm:$0xf]
      %v1691 = vperm.slane %v1689, 0
      %v1692 = vperm.slane %v1689, 1
      %v1693 = vperm.slane %v1689, 2
      %v1694 = vperm.slane %v1689, 3
      %v1695 = vrot.slane %v1692, 6
      %v1696 = vrot.slane %v1693, 4
      %v1697 = vrot.slane %v1694, 2
      %v1698 = vsel %vm1559, %v1691, %v1695
      %v1699 = vsel %vm1561, %v1696, %v1697
      %v1700 = vsel %vm1563, %v1698, %v1699
      %v1702 = vadd.f32 %v1688, %v1700
      %vm1703 = vcmp.gt.f32.partialorder %v1702, 0.0
      %v1704 = vmul.f32 %v1702, 0.2
      %v1705 = vsel %vm1703, %v1702, %v1704
      %v1706 = vld [vmem:[#allocation6] sm:$0xff]
      %v1707 = vld [vmem:[#allocation6 + $0x8] sm:$0xff]
      %v1708 = vld [vmem:[#allocation6 + $0x10] sm:$0xff]
      %v1709 = vld [vmem:[#allocation6 + $0x18] sm:$0xff]
      %v1710 = vld [vmem:[#allocation6 + $0x20] sm:$0xff]
      %v1711 = vld [vmem:[#allocation6 + $0x28] sm:$0xff]
      %v1712 = vld [vmem:[#allocation6 + $0x30] sm:$0xff]
      %v1713 = vld [vmem:[#allocation6 + $0x38] sm:$0xff]
      %v1714 = vld [vmem:[#allocation6 + $0x40] sm:$0xff]
      %v1715 = vld [vmem:[#allocation6 + $0x48] sm:$0xff]
      %v1716 = vld [vmem:[#allocation6 + $0x50] sm:$0xff]
      %v1717 = vld [vmem:[#allocation6 + $0x58] sm:$0xff]
      %v1718 = vld [vmem:[#allocation6 + $0x60] sm:$0xff]
      %v1719 = vld [vmem:[#allocation6 + $0x68] sm:$0xff]
      %v1720 = vld [vmem:[#allocation6 + $0x70] sm:$0xff]
      %v1721 = vld [vmem:[#allocation6 + $0x78] sm:$0xff]
      %v1722 = vld [vmem:[#allocation6 + $0x80] sm:$0xff]
      %v1723 = vld [vmem:[#allocation6 + $0x88] sm:$0xff]
      %v1724 = vld [vmem:[#allocation6 + $0x90] sm:$0xff]
      %v1725 = vld [vmem:[#allocation6 + $0x98] sm:$0xff]
      %v1726 = vld [vmem:[#allocation6 + $0xa0] sm:$0xff]
      %v1727 = vld [vmem:[#allocation6 + $0xa8] sm:$0xff]
      %v1728 = vld [vmem:[#allocation6 + $0xb0] sm:$0xff]
      %v1729 = vld [vmem:[#allocation6 + $0xb8] sm:$0xff]
      %v1730 = vld [vmem:[#allocation6 + $0xc0] sm:$0xff]
      %v1731 = vld [vmem:[#allocation6 + $0xc8] sm:$0xff]
      %v1732 = vld [vmem:[#allocation6 + $0xd0] sm:$0xff]
      %v1733 = vld [vmem:[#allocation6 + $0xd8] sm:$0xff]
      %v1734 = vld [vmem:[#allocation6 + $0xe0] sm:$0xff]
      %v1735 = vld [vmem:[#allocation6 + $0xe8] sm:$0xff]
      %v1736 = vld [vmem:[#allocation6 + $0xf0] sm:$0xff]
      %v1737 = vld [vmem:[#allocation6 + $0xf8] sm:$0xff]
      %v1738 = vld [vmem:[#allocation6 + $0x100] sm:$0xff]
      %v1739 = vld [vmem:[#allocation6 + $0x108] sm:$0xff]
      %v1740 = vld [vmem:[#allocation6 + $0x110] sm:$0xff]
      %v1741 = vld [vmem:[#allocation6 + $0x118] sm:$0xff]
      %v1742 = vld [vmem:[#allocation6 + $0x120] sm:$0xff]
      %v1743 = vld [vmem:[#allocation6 + $0x128] sm:$0xff]
      %v1744 = vld [vmem:[#allocation6 + $0x130] sm:$0xff]
      %v1745 = vld [vmem:[#allocation6 + $0x138] sm:$0xff]
      %v1746 = vld [vmem:[#allocation6 + $0x140] sm:$0xff]
      %v1747 = vld [vmem:[#allocation6 + $0x148] sm:$0xff]
      %v1748 = vld [vmem:[#allocation6 + $0x150] sm:$0xff]
      %v1749 = vld [vmem:[#allocation6 + $0x158] sm:$0xff]
      %v1750 = vld [vmem:[#allocation6 + $0x160] sm:$0xff]
      %v1751 = vld [vmem:[#allocation6 + $0x168] sm:$0xff]
      %v1752 = vld [vmem:[#allocation6 + $0x170] sm:$0xff]
      %v1753 = vld [vmem:[#allocation6 + $0x178] sm:$0xff]
      %v1754 = vld [vmem:[#allocation6 + $0x180] sm:$0xff]
      %v1755 = vld [vmem:[#allocation6 + $0x188] sm:$0xff]
      %v1756 = vld [vmem:[#allocation6 + $0x190] sm:$0xff]
      %v1757 = vld [vmem:[#allocation6 + $0x198] sm:$0xff]
      %v1758 = vld [vmem:[#allocation6 + $0x1a0] sm:$0xff]
      %v1759 = vld [vmem:[#allocation6 + $0x1a8] sm:$0xff]
      %v1760 = vld [vmem:[#allocation6 + $0x1b0] sm:$0xff]
      %v1761 = vld [vmem:[#allocation6 + $0x1b8] sm:$0xff]
      %v1762 = vld [vmem:[#allocation6 + $0x1c0] sm:$0xff]
      %v1763 = vld [vmem:[#allocation6 + $0x1c8] sm:$0xff]
      %v1764 = vld [vmem:[#allocation6 + $0x1d0] sm:$0xff]
      %v1765 = vld [vmem:[#allocation6 + $0x1d8] sm:$0xff]
      %v1766 = vld [vmem:[#allocation6 + $0x1e0] sm:$0xff]
      %v1767 = vld [vmem:[#allocation6 + $0x1e8] sm:$0xff]
      %v1768 = vld [vmem:[#allocation6 + $0x1f0] sm:$0xff]
      %v1769 = vld [vmem:[#allocation6 + $0x1f8] sm:$0xff]
      %v1770 = vld [vmem:[#allocation6 + $0x200] sm:$0xff]
      %v1771 = vld [vmem:[#allocation6 + $0x208] sm:$0xff]
      %v1772 = vld [vmem:[#allocation6 + $0x210] sm:$0xff]
      %v1773 = vld [vmem:[#allocation6 + $0x218] sm:$0xff]
      %v1774 = vld [vmem:[#allocation6 + $0x220] sm:$0xff]
      %v1775 = vld [vmem:[#allocation6 + $0x228] sm:$0xff]
      %v1776 = vld [vmem:[#allocation6 + $0x230] sm:$0xff]
      %v1777 = vld [vmem:[#allocation6 + $0x238] sm:$0xff]
      %v1778 = vld [vmem:[#allocation6 + $0x240] sm:$0xff]
      %v1779 = vld [vmem:[#allocation6 + $0x248] sm:$0xff]
      %v1780 = vld [vmem:[#allocation6 + $0x250] sm:$0xff]
      %v1781 = vld [vmem:[#allocation6 + $0x258] sm:$0xff]
      %v1782 = vld [vmem:[#allocation6 + $0x260] sm:$0xff]
      %v1783 = vld [vmem:[#allocation6 + $0x268] sm:$0xff]
      %v1784 = vld [vmem:[#allocation6 + $0x270] sm:$0xff]
      %v1785 = vld [vmem:[#allocation6 + $0x278] sm:$0xff]
      %v1786 = vld [vmem:[#allocation6 + $0x280] sm:$0xff]
      %v1787 = vld [vmem:[#allocation6 + $0x288] sm:$0xff]
      %v1788 = vld [vmem:[#allocation6 + $0x290] sm:$0xff]
      %v1789 = vld [vmem:[#allocation6 + $0x298] sm:$0xff]
      %v1790 = vld [vmem:[#allocation6 + $0x2a0] sm:$0xff]
      %v1791 = vld [vmem:[#allocation6 + $0x2a8] sm:$0xff]
      %v1792 = vld [vmem:[#allocation6 + $0x2b0] sm:$0xff]
      %v1793 = vld [vmem:[#allocation6 + $0x2b8] sm:$0xff]
      %v1794 = vld [vmem:[#allocation6 + $0x2c0] sm:$0xff]
      %v1795 = vld [vmem:[#allocation6 + $0x2c8] sm:$0xff]
      %v1796 = vld [vmem:[#allocation6 + $0x2d0] sm:$0xff]
      %v1797 = vld [vmem:[#allocation6 + $0x2d8] sm:$0xff]
      %v1798 = vld [vmem:[#allocation6 + $0x2e0] sm:$0xff]
      %v1799 = vld [vmem:[#allocation6 + $0x2e8] sm:$0xff]
      %v1800 = vld [vmem:[#allocation6 + $0x2f0] sm:$0xff]
      %v1801 = vld [vmem:[#allocation6 + $0x2f8] sm:$0xff]
      %v1802 = vld [vmem:[#allocation6 + $0x300] sm:$0xff]
      %v1803 = vld [vmem:[#allocation6 + $0x308] sm:$0xff]
      %v1804 = vld [vmem:[#allocation6 + $0x310] sm:$0xff]
      %v1805 = vld [vmem:[#allocation6 + $0x318] sm:$0xff]
      %v1806 = vld [vmem:[#allocation6 + $0x320] sm:$0xff]
      %v1807 = vld [vmem:[#allocation6 + $0x328] sm:$0xff]
      %v1808 = vld [vmem:[#allocation6 + $0x330] sm:$0xff]
      %v1809 = vld [vmem:[#allocation6 + $0x338] sm:$0xff]
      %v1810 = vld [vmem:[#allocation6 + $0x340] sm:$0xff]
      %v1811 = vld [vmem:[#allocation6 + $0x348] sm:$0xff]
      %v1812 = vld [vmem:[#allocation6 + $0x350] sm:$0xff]
      %v1813 = vld [vmem:[#allocation6 + $0x358] sm:$0xff]
      %v1814 = vld [vmem:[#allocation6 + $0x360] sm:$0xff]
      %v1815 = vld [vmem:[#allocation6 + $0x368] sm:$0xff]
      %v1816 = vld [vmem:[#allocation6 + $0x370] sm:$0xff]
      %v1817 = vld [vmem:[#allocation6 + $0x378] sm:$0xff]
      %v1818 = vld [vmem:[#allocation6 + $0x380] sm:$0xff]
      %v1819 = vld [vmem:[#allocation6 + $0x388] sm:$0xff]
      %v1820 = vld [vmem:[#allocation6 + $0x390] sm:$0xff]
      %v1821 = vld [vmem:[#allocation6 + $0x398] sm:$0xff]
      %v1822 = vld [vmem:[#allocation6 + $0x3a0] sm:$0xff]
      %v1823 = vld [vmem:[#allocation6 + $0x3a8] sm:$0xff]
      %v1824 = vld [vmem:[#allocation6 + $0x3b0] sm:$0xff]
      %v1825 = vld [vmem:[#allocation6 + $0x3b8] sm:$0xff]
      %v1826 = vld [vmem:[#allocation6 + $0x3c0] sm:$0xff]
      %v1827 = vld [vmem:[#allocation6 + $0x3c8] sm:$0xff]
      %v1828 = vld [vmem:[#allocation6 + $0x3d0] sm:$0xff]
      %v1829 = vld [vmem:[#allocation6 + $0x3d8] sm:$0xff]
      %v1830 = vld [vmem:[#allocation6 + $0x3e0] sm:$0xff]
      %v1831 = vld [vmem:[#allocation6 + $0x3e8] sm:$0xff]
      %v1832 = vld [vmem:[#allocation6 + $0x3f0] sm:$0xff]
      %v1833 = vld [vmem:[#allocation6 + $0x3f8] sm:$0xff]
      %v1834 = vld [vmem:[%s6] sm:$0x3]
      %v1836 = vperm.slane %v1834, 0
      %v1837 = vperm.slane %v1834, 1
      %1841 = vst [vmem:[#allocation1] ss:$4 sm:$0xff] %v1705
      %v1842 = vld.sshfl [vmem:[#allocation1] sm:$0xff pattern:$0x73625140]
      %v1843 = vld.sshfl [vmem:[#allocation1 + $0x8] sm:$0xff pattern:$0x73625140]
      %v1844 = vld.sshfl [vmem:[#allocation1 + $0x10] sm:$0xff pattern:$0x73625140]
      %v1845 = vld.sshfl [vmem:[#allocation1 + $0x18] sm:$0xff pattern:$0x73625140]
      %1850 = vmatpush.msra.mxu0 %v1736
      %1851 = vmatpush.msra.mxu0 %v1734
      %1852 = vmatpush.msra.mxu0 %v1732
      %1853 = vmatpush.msra.mxu0 %v1730
      %1854 = vmatpush.msra.mxu0 %v1728
      %1855 = vmatpush.msra.mxu0 %v1726
      %1856 = vmatpush.msra.mxu0 %v1724
      %1857 = vmatpush.msra.mxu0 %v1722
      %1858 = vmatpush.msra.mxu0 %v1720
      %1859 = vmatpush.msra.mxu0 %v1718
      %1860 = vmatpush.msra.mxu0 %v1716
      %1861 = vmatpush.msra.mxu0 %v1714
      %1862 = vmatpush.msra.mxu0 %v1712
      %1863 = vmatpush.msra.mxu0 %v1710
      %1864 = vmatpush.msra.mxu0 %v1708
      %1865 = vmatpush.msra.mxu0 %v1706
      %1866 = vmatmul.f32.gmra.mxu0 %v1842
      %v1867 = vpop.f32.mrf.mxu0
      %v1868 = vadd.f32 %v1836, %v1867
      %1869 = vdwg.mxu0
      %1870 = vmatpush.msra.mxu0 %v1768
      %1871 = vmatpush.msra.mxu0 %v1766
      %1872 = vmatpush.msra.mxu0 %v1764
      %1873 = vmatpush.msra.mxu0 %v1762
      %1874 = vmatpush.msra.mxu0 %v1760
      %1875 = vmatpush.msra.mxu0 %v1758
      %1876 = vmatpush.msra.mxu0 %v1756
      %1877 = vmatpush.msra.mxu0 %v1754
      %1878 = vmatpush.msra.mxu0 %v1752
      %1879 = vmatpush.msra.mxu0 %v1750
      %1880 = vmatpush.msra.mxu0 %v1748
      %1881 = vmatpush.msra.mxu0 %v1746
      %1882 = vmatpush.msra.mxu0 %v1744
      %1883 = vmatpush.msra.mxu0 %v1742
      %1884 = vmatpush.msra.mxu0 %v1740
      %1885 = vmatpush.msra.mxu0 %v1738
      %1886 = vmatmul.f32.gmra.mxu0 %v1843
      %v1887 = vpop.f32.mrf.mxu0
      %v1888 = vadd.f32 %v1868, %v1887
      %1889 = vdwg.mxu0
      %1890 = vmatpush.msra.mxu0 %v1800
      %1891 = vmatpush.msra.mxu0 %v1798
      %1892 = vmatpush.msra.mxu0 %v1796
      %1893 = vmatpush.msra.mxu0 %v1794
      %1894 = vmatpush.msra.mxu0 %v1792
      %1895 = vmatpush.msra.mxu0 %v1790
      %1896 = vmatpush.msra.mxu0 %v1788
      %1897 = vmatpush.msra.mxu0 %v1786
      %1898 = vmatpush.msra.mxu0 %v1784
      %1899 = vmatpush.msra.mxu0 %v1782
      %1900 = vmatpush.msra.mxu0 %v1780
      %1901 = vmatpush.msra.mxu0 %v1778
      %1902 = vmatpush.msra.mxu0 %v1776
      %1903 = vmatpush.msra.mxu0 %v1774
      %1904 = vmatpush.msra.mxu0 %v1772
      %1905 = vmatpush.msra.mxu0 %v1770
      %1906 = vmatmul.f32.gmra.mxu0 %v1844
      %v1907 = vpop.f32.mrf.mxu0
      %v1908 = vadd.f32 %v1888, %v1907
      %1909 = vdwg.mxu0
      %1910 = vmatpush.msra.mxu0 %v1832
      %1911 = vmatpush.msra.mxu0 %v1830
      %1912 = vmatpush.msra.mxu0 %v1828
      %1913 = vmatpush.msra.mxu0 %v1826
      %1914 = vmatpush.msra.mxu0 %v1824
      %1915 = vmatpush.msra.mxu0 %v1822
      %1916 = vmatpush.msra.mxu0 %v1820
      %1917 = vmatpush.msra.mxu0 %v1818
      %1918 = vmatpush.msra.mxu0 %v1816
      %1919 = vmatpush.msra.mxu0 %v1814
      %1920 = vmatpush.msra.mxu0 %v1812
      %1921 = vmatpush.msra.mxu0 %v1810
      %1922 = vmatpush.msra.mxu0 %v1808
      %1923 = vmatpush.msra.mxu0 %v1806
      %1924 = vmatpush.msra.mxu0 %v1804
      %1925 = vmatpush.msra.mxu0 %v1802
      %1926 = vmatmul.f32.gmra.mxu0 %v1845
      %v1927 = vpop.f32.mrf.mxu0
      %v1928 = vadd.f32 %v1908, %v1927
      %1929 = vdwg.mxu0
      %1930 = vmatpush.msra.mxu0 %v1737
      %1931 = vmatpush.msra.mxu0 %v1735
      %1932 = vmatpush.msra.mxu0 %v1733
      %1933 = vmatpush.msra.mxu0 %v1731
      %1934 = vmatpush.msra.mxu0 %v1729
      %1935 = vmatpush.msra.mxu0 %v1727
      %1936 = vmatpush.msra.mxu0 %v1725
      %1937 = vmatpush.msra.mxu0 %v1723
      %1938 = vmatpush.msra.mxu0 %v1721
      %1939 = vmatpush.msra.mxu0 %v1719
      %1940 = vmatpush.msra.mxu0 %v1717
      %1941 = vmatpush.msra.mxu0 %v1715
      %1942 = vmatpush.msra.mxu0 %v1713
      %1943 = vmatpush.msra.mxu0 %v1711
      %1944 = vmatpush.msra.mxu0 %v1709
      %1945 = vmatpush.msra.mxu0 %v1707
      %1946 = vmatmul.f32.gmra.mxu0 %v1842
      %v1947 = vpop.f32.mrf.mxu0
      %v1948 = vadd.f32 %v1837, %v1947
      %1949 = vdwg.mxu0
      %1950 = vmatpush.msra.mxu0 %v1769
      %1951 = vmatpush.msra.mxu0 %v1767
      %1952 = vmatpush.msra.mxu0 %v1765
      %1953 = vmatpush.msra.mxu0 %v1763
      %1954 = vmatpush.msra.mxu0 %v1761
      %1955 = vmatpush.msra.mxu0 %v1759
      %1956 = vmatpush.msra.mxu0 %v1757
      %1957 = vmatpush.msra.mxu0 %v1755
      %1958 = vmatpush.msra.mxu0 %v1753
      %1959 = vmatpush.msra.mxu0 %v1751
      %1960 = vmatpush.msra.mxu0 %v1749
      %1961 = vmatpush.msra.mxu0 %v1747
      %1962 = vmatpush.msra.mxu0 %v1745
      %1963 = vmatpush.msra.mxu0 %v1743
      %1964 = vmatpush.msra.mxu0 %v1741
      %1965 = vmatpush.msra.mxu0 %v1739
      %1966 = vmatmul.f32.gmra.mxu0 %v1843
      %v1967 = vpop.f32.mrf.mxu0
      %v1968 = vadd.f32 %v1948, %v1967
      %1969 = vdwg.mxu0
      %1970 = vmatpush.msra.mxu0 %v1801
      %1971 = vmatpush.msra.mxu0 %v1799
      %1972 = vmatpush.msra.mxu0 %v1797
      %1973 = vmatpush.msra.mxu0 %v1795
      %1974 = vmatpush.msra.mxu0 %v1793
      %1975 = vmatpush.msra.mxu0 %v1791
      %1976 = vmatpush.msra.mxu0 %v1789
      %1977 = vmatpush.msra.mxu0 %v1787
      %1978 = vmatpush.msra.mxu0 %v1785
      %1979 = vmatpush.msra.mxu0 %v1783
      %1980 = vmatpush.msra.mxu0 %v1781
      %1981 = vmatpush.msra.mxu0 %v1779
      %1982 = vmatpush.msra.mxu0 %v1777
      %1983 = vmatpush.msra.mxu0 %v1775
      %1984 = vmatpush.msra.mxu0 %v1773
      %1985 = vmatpush.msra.mxu0 %v1771
      %1986 = vmatmul.f32.gmra.mxu0 %v1844
      %v1987 = vpop.f32.mrf.mxu0
      %v1988 = vadd.f32 %v1968, %v1987
      %1989 = vdwg.mxu0
      %1990 = vmatpush.msra.mxu0 %v1833
      %1991 = vmatpush.msra.mxu0 %v1831
      %1992 = vmatpush.msra.mxu0 %v1829
      %1993 = vmatpush.msra.mxu0 %v1827
      %1994 = vmatpush.msra.mxu0 %v1825
      %1995 = vmatpush.msra.mxu0 %v1823
      %1996 = vmatpush.msra.mxu0 %v1821
      %1997 = vmatpush.msra.mxu0 %v1819
      %1998 = vmatpush.msra.mxu0 %v1817
      %1999 = vmatpush.msra.mxu0 %v1815
      %2000 = vmatpush.msra.mxu0 %v1813
      %2001 = vmatpush.msra.mxu0 %v1811
      %2002 = vmatpush.msra.mxu0 %v1809
      %2003 = vmatpush.msra.mxu0 %v1807
      %2004 = vmatpush.msra.mxu0 %v1805
      %2005 = vmatpush.msra.mxu0 %v1803
      %2006 = vmatmul.f32.gmra.mxu0 %v1845
      %v2007 = vpop.f32.mrf.mxu0
      %v2008 = vadd.f32 %v1988, %v2007
      %2009 = vdwg.mxu0
      %vm2010 = vcmp.gt.f32.partialorder %v1928, 0.0
      %vm2011 = vcmp.gt.f32.partialorder %v2008, 0.0
      %v2012 = vmul.f32 %v1928, 0.2
      %v2013 = vmul.f32 %v2008, 0.2
      %v2014 = vsel %vm2010, %v1928, %v2012
      %v2015 = vsel %vm2011, %v2008, %v2013
      %v2016 = vld [vmem:[%s7] sm:$0xff]
      %v2017 = vld [vmem:[%s7 + $0x8] sm:$0xff]
      %v2018 = vld [vmem:[%s7 + $0x10] sm:$0xff]
      %v2019 = vld [vmem:[%s7 + $0x18] sm:$0xff]
      %v2020 = vld [vmem:[%s7 + $0x20] sm:$0xff]
      %v2021 = vld [vmem:[%s7 + $0x28] sm:$0xff]
      %v2022 = vld [vmem:[%s7 + $0x30] sm:$0xff]
      %v2023 = vld [vmem:[%s7 + $0x38] sm:$0xff]
      %v2024 = vld [vmem:[%s7 + $0x40] sm:$0xff]
      %v2025 = vld [vmem:[%s7 + $0x48] sm:$0xff]
      %v2026 = vld [vmem:[%s7 + $0x50] sm:$0xff]
      %v2027 = vld [vmem:[%s7 + $0x58] sm:$0xff]
      %v2028 = vld [vmem:[%s7 + $0x60] sm:$0xff]
      %v2029 = vld [vmem:[%s7 + $0x68] sm:$0xff]
      %v2030 = vld [vmem:[%s7 + $0x70] sm:$0xff]
      %v2031 = vld [vmem:[%s7 + $0x78] sm:$0xff]
      %v2032 = vld [vmem:[%s7 + $0x80] sm:$0xff]
      %v2033 = vld [vmem:[%s7 + $0x88] sm:$0xff]
      %v2034 = vld [vmem:[%s7 + $0x90] sm:$0xff]
      %v2035 = vld [vmem:[%s7 + $0x98] sm:$0xff]
      %v2036 = vld [vmem:[%s7 + $0xa0] sm:$0xff]
      %v2037 = vld [vmem:[%s7 + $0xa8] sm:$0xff]
      %v2038 = vld [vmem:[%s7 + $0xb0] sm:$0xff]
      %v2039 = vld [vmem:[%s7 + $0xb8] sm:$0xff]
      %v2040 = vld [vmem:[%s7 + $0xc0] sm:$0xff]
      %v2041 = vld [vmem:[%s7 + $0xc8] sm:$0xff]
      %v2042 = vld [vmem:[%s7 + $0xd0] sm:$0xff]
      %v2043 = vld [vmem:[%s7 + $0xd8] sm:$0xff]
      %v2044 = vld [vmem:[%s7 + $0xe0] sm:$0xff]
      %v2045 = vld [vmem:[%s7 + $0xe8] sm:$0xff]
      %v2046 = vld [vmem:[%s7 + $0xf0] sm:$0xff]
      %v2047 = vld [vmem:[%s7 + $0xf8] sm:$0xff]
      %v2048 = vld [vmem:[#allocation3] sm:$0x1]
      %v2050 = vperm.slane %v2048, 0
      %2052 = vmatpush.msra.mxu0 %v2031
      %2053 = vmatpush.msra.mxu0 %v2030
      %2054 = vmatpush.msra.mxu0 %v2029
      %2055 = vmatpush.msra.mxu0 %v2028
      %2056 = vmatpush.msra.mxu0 %v2027
      %2057 = vmatpush.msra.mxu0 %v2026
      %2058 = vmatpush.msra.mxu0 %v2025
      %2059 = vmatpush.msra.mxu0 %v2024
      %2060 = vmatpush.msra.mxu0 %v2023
      %2061 = vmatpush.msra.mxu0 %v2022
      %2062 = vmatpush.msra.mxu0 %v2021
      %2063 = vmatpush.msra.mxu0 %v2020
      %2064 = vmatpush.msra.mxu0 %v2019
      %2065 = vmatpush.msra.mxu0 %v2018
      %2066 = vmatpush.msra.mxu0 %v2017
      %2067 = vmatpush.msra.mxu0 %v2016
      %2068 = vmatmul.f32.gmra.mxu0 %v2014
      %v2069 = vpop.f32.mrf.mxu0
      %v2070 = vadd.f32 %v2050, %v2069
      %2071 = vdwg.mxu0
      %2072 = vmatpush.msra.mxu0 %v2047
      %2073 = vmatpush.msra.mxu0 %v2046
      %2074 = vmatpush.msra.mxu0 %v2045
      %2075 = vmatpush.msra.mxu0 %v2044
      %2076 = vmatpush.msra.mxu0 %v2043
      %2077 = vmatpush.msra.mxu0 %v2042
      %2078 = vmatpush.msra.mxu0 %v2041
      %2079 = vmatpush.msra.mxu0 %v2040
      %2080 = vmatpush.msra.mxu0 %v2039
      %2081 = vmatpush.msra.mxu0 %v2038
      %2082 = vmatpush.msra.mxu0 %v2037
      %2083 = vmatpush.msra.mxu0 %v2036
      %2084 = vmatpush.msra.mxu0 %v2035
      %2085 = vmatpush.msra.mxu0 %v2034
      %2086 = vmatpush.msra.mxu0 %v2033
      %2087 = vmatpush.msra.mxu0 %v2032
      %2088 = vmatmul.f32.gmra.mxu0 %v2015
      %v2089 = vpop.f32.mrf.mxu0
      %v2090 = vadd.f32 %v2070, %v2089
      %2091 = vdwg.mxu0
      %v2092 = vxor.u32 %v2090, 2147483648
      %v2093 = vmul.f32 %v2092, 1.442695
      %v2094 = vpow.pop %v2093
      %v2095 = vadd.f32 %v2094, 1.0
      %v2096 = vrcp.pop %v2095
      %v2097 = vmul.f32 %v2095, %v2096
      %v2098 = vsub.f32 1.0, %v2097
      %v2099 = vmul.f32 %v2096, %v2098
      %v2100 = vadd.f32 %v2096, %v2099
      %vm2101 = vweird.f32 %v2095
      %vm2102 = vweird.f32 %v2096
      %vm2103 = vmor %vm2101, %vm2102
      %v2104 = vsel %vm2103, %v2096, %v2100
      %v2105 = vand.u32 2147483647, %v2095
      %vm2106 = vcmp.eq.f32.partialorder %v2105, 8.507059e+37
      %v2107 = vand.u32 %v2095, 2147483648
      %v2108 = vor.u32 1.1754944e-38, %v2107
      %v2109 = vsel %vm2106, %v2108, %v2104
      %v2110 = vmul.f32 1.0, %v2109
      %vm2111 = vcmask 1024
      %2112 = vst.msk [vmem:[%s9] sm:$0x3] %vm2111, %v2110
    $region53: #{tpu_custom_call.1} parent=1 // pred_fallthru
      _
    // Predicated region
    $region54: #{tpu_custom_call.1} parent=1 // pred_check
      _
    $region55: #{tpu_custom_call.1} parent=1 // pred_check_branch
      %2114 = sbr.rel (0) target = $region57
    $region56: #{tpu_custom_call.1} parent=1 // pred_region
      _
    $region57: #{tpu_custom_call.1} parent=1 // pred_fallthru
      _
    // Predicated region
    $region58: #{tpu_custom_call.1} parent=1 // pred_check
      _
    $region59: #{tpu_custom_call.1} parent=1 // pred_check_branch
      %2116 = sbr.rel (0) target = $region61
    $region60: #{tpu_custom_call.1} parent=1 // pred_region
      _
    $region61: #{tpu_custom_call.1} parent=1 // pred_fallthru
      _
    %2117 = vsyncpa [#allocation5], 1
    %2118 = vsyncpa [#allocation7], 1

</llo_original>
